<compile_context>
chip_gen: v6e
topology: v6e:2x2x1
jax: 0.10.0
libtpu: 0.0.40
codegen_flags: <defaults>
</compile_context>

<pallas_src>
import math
import functools

import jax
import jax.numpy as jnp
from jax.experimental import pallas as pl
from jax.experimental.pallas import tpu as pltpu


# ----------------------------- tiling helpers -----------------------------

_VMEM_LIMIT = 32 * 1024 * 1024  # scoped VMEM budget for the matmul-ish kernels


def _pick_tile(dim, preferred=512):
    """Largest tile among (preferred, 256, 128) that divides dim, else the full dim."""
    if dim <= preferred:
        return dim
    for cand in (preferred, 256, 128):
        if cand <= preferred and dim % cand == 0:
            return cand
    return dim


# ----------------------------- Pallas kernels -----------------------------

def _linear_kernel(x_ref, w_ref, b_ref, o_ref, acc_ref, *, relu, n_k):
    k = pl.program_id(2)

    @pl.when(k == 0)
    def _():
        acc_ref[...] = jnp.zeros_like(acc_ref)

    acc_ref[...] += jnp.dot(x_ref[...].astype(jnp.bfloat16), w_ref[...],
                            preferred_element_type=jnp.float32)

    @pl.when(k == n_k - 1)
    def _():
        r = acc_ref[...] + b_ref[...]
        if relu:
            r = jnp.maximum(r, 0.0)
        o_ref[...] = r


def linear(x, w, b, relu=False):
    """x: [M, K] f32, w: [K, N] bf16, b: [N] f32 -> [M, N] f32 (optional fused ReLU)."""
    M, K = x.shape
    N = w.shape[1]
    tm = _pick_tile(M, 512)
    tn = _pick_tile(N, 512)
    tk = _pick_tile(K, 512)
    n_k = K // tk
    return pl.pallas_call(
        functools.partial(_linear_kernel, relu=relu, n_k=n_k),
        out_shape=jax.ShapeDtypeStruct((M, N), jnp.float32),
        grid=(M // tm, N // tn, n_k),
        in_specs=[pl.BlockSpec((tm, tk), lambda m, n, k: (m, k)),
                  pl.BlockSpec((tk, tn), lambda m, n, k: (k, n)),
                  pl.BlockSpec((1, tn), lambda m, n, k: (0, n))],
        out_specs=pl.BlockSpec((tm, tn), lambda m, n, k: (m, n)),
        scratch_shapes=[pltpu.VMEM((tm, tn), jnp.float32)],
        compiler_params=pltpu.CompilerParams(
            dimension_semantics=("parallel", "parallel", "arbitrary"),
            vmem_limit_bytes=_VMEM_LIMIT),
    )(x, w, b.reshape(1, N))


def _layernorm_kernel(x_ref, g_ref, b_ref, o_ref, *, eps):
    x = x_ref[...]
    n = x.shape[-1]
    mean = jnp.mean(x, axis=-1, keepdims=True)
    xc = x - mean
    # Annotated-Transformer LayerNorm: unbiased std, eps added to std.
    var = jnp.sum(xc * xc, axis=-1, keepdims=True) * (1.0 / (n - 1))
    std = jnp.sqrt(var)
    o_ref[...] = g_ref[...] * xc / (std + eps) + b_ref[...]


def layernorm(x, g, b, eps=1e-6):
    """x: [M, D] f32, g/b: [D] f32."""
    M, D = x.shape
    tm = _pick_tile(M, 512)
    return pl.pallas_call(
        functools.partial(_layernorm_kernel, eps=eps),
        out_shape=jax.ShapeDtypeStruct((M, D), jnp.float32),
        grid=(M // tm,),
        in_specs=[pl.BlockSpec((tm, D), lambda i: (i, 0)),
                  pl.BlockSpec((1, D), lambda i: (0, 0)),
                  pl.BlockSpec((1, D), lambda i: (0, 0))],
        out_specs=pl.BlockSpec((tm, D), lambda i: (i, 0)),
        compiler_params=pltpu.CompilerParams(dimension_semantics=("parallel",)),
    )(x, g.reshape(1, D), b.reshape(1, D))


def _mha_kernel(q_ref, k_ref, v_ref, m_ref, o_ref, *, heads, scale):
    """One batch element: all heads, lane-dense (Sq, D) output."""
    q = q_ref[...]                                     # (Sq, D) f32
    k = k_ref[...]                                     # (Sk, D) f32
    v = v_ref[...]                                     # (Sk, D) f32
    maskf = m_ref[...].astype(jnp.float32)             # (Sq, Sk), {0,1}
    dh = q.shape[-1] // heads
    neg = jnp.float32(-1e9)
    outs = []
    for h in range(heads):                             # static, unrolled
        sl = slice(h * dh, (h + 1) * dh)
        qh = q[:, sl].astype(jnp.bfloat16)
        kh = k[:, sl].astype(jnp.bfloat16)
        vh = v[:, sl].astype(jnp.bfloat16)
        s = jax.lax.dot_general(qh, kh, (((1,), (1,)), ((), ())),
                                preferred_element_type=jnp.float32) * scale
        s = jnp.where(maskf == 0.0, neg, s)            # masked_fill(mask == 0, -1e9)
        s = s - jnp.max(s, axis=-1, keepdims=True)
        p = jnp.exp(s)
        p = p * pl.reciprocal(jnp.sum(p, axis=-1, keepdims=True), approx=True)
        outs.append(jnp.dot(p.astype(jnp.bfloat16), vh,
                            preferred_element_type=jnp.float32))
    o_ref[...] = jnp.concatenate(outs, axis=-1)        # single lane-dense store


def attention_bsd(q, k, v, mask, heads):
    """q: [B,Sq,D], k/v: [B,Sk,D], mask broadcastable to [B,Sq,Sk] -> [B,Sq,D]."""
    B, Sq, D = q.shape
    Sk = k.shape[1]
    dh = D // heads
    scale = 1.0 / math.sqrt(dh)
    mask_i8 = jnp.broadcast_to(mask, (B, Sq, Sk)).astype(jnp.int8)   # 1 byte/elem
    return pl.pallas_call(
        functools.partial(_mha_kernel, heads=heads, scale=scale),
        out_shape=jax.ShapeDtypeStruct((B, Sq, D), jnp.float32),
        grid=(B,),
        in_specs=[pl.BlockSpec((None, Sq, D), lambda b: (b, 0, 0)),
                  pl.BlockSpec((None, Sk, D), lambda b: (b, 0, 0)),
                  pl.BlockSpec((None, Sk, D), lambda b: (b, 0, 0)),
                  pl.BlockSpec((None, Sq, Sk), lambda b: (b, 0, 0))],
        out_specs=pl.BlockSpec((None, Sq, D), lambda b: (b, 0, 0)),
        compiler_params=pltpu.CompilerParams(
            dimension_semantics=("parallel",),
            vmem_limit_bytes=_VMEM_LIMIT),
    )(q, k, v, mask_i8)


def _generator_kernel(x_ref, w_ref, b_ref, o_ref, logits_ref, *, n_n, tn):
    """Fused generator: tiled matmul into a VMEM logits row-block, then log_softmax."""
    n = pl.program_id(1)
    lg = jnp.dot(x_ref[...].astype(jnp.bfloat16), w_ref[...],
                 preferred_element_type=jnp.float32) + b_ref[...]
    if n_n == 1:
        logits_ref[...] = lg
    else:
        logits_ref[:, pl.ds(pl.multiple_of(n * tn, tn), tn)] = lg

    @pl.when(n == n_n - 1)
    def _():
        full = logits_ref[...]
        mx = jnp.max(full, axis=-1, keepdims=True)
        s = full - mx
        lse = jnp.log(jnp.sum(jnp.exp(s), axis=-1, keepdims=True))
        o_ref[...] = s - lse


def generator_logprobs(x, w, b):
    """x: [M, D] f32, w: [D, V] bf16, b: [V] f32 -> log_softmax(x @ w + b) [M, V]."""
    M, D = x.shape
    V = w.shape[1]
    tm = _pick_tile(M, 256)      # bounds the (tm, V) f32 logits scratch
    tn = _pick_tile(V, 512)
    n_n = V // tn
    return pl.pallas_call(
        functools.partial(_generator_kernel, n_n=n_n, tn=tn),
        out_shape=jax.ShapeDtypeStruct((M, V), jnp.float32),
        grid=(M // tm, n_n),
        in_specs=[pl.BlockSpec((tm, D), lambda m, n: (m, 0)),
                  pl.BlockSpec((D, tn), lambda m, n: (0, n)),
                  pl.BlockSpec((1, tn), lambda m, n: (0, n))],
        out_specs=pl.BlockSpec((tm, V), lambda m, n: (m, 0)),
        scratch_shapes=[pltpu.VMEM((tm, V), jnp.float32)],
        compiler_params=pltpu.CompilerParams(
            dimension_semantics=("parallel", "arbitrary"),
            vmem_limit_bytes=_VMEM_LIMIT),
    )(x, w, b.reshape(1, V))


# ----------------------------- model glue (plain JAX) -----------------------------

def multi_head_self_attention(x, mask, p, heads):
    B, S, D = x.shape
    qkv = linear(x.reshape(B * S, D), p["w_qkv"], p["b_qkv"]).reshape(B, S, 3 * D)
    q, k, v = qkv[..., :D], qkv[..., D:2 * D], qkv[..., 2 * D:]
    o = attention_bsd(q, k, v, mask, heads)                          # [B, S, D]
    return linear(o.reshape(B * S, D), p["wo"], p["bo"]).reshape(B, S, D)


def multi_head_cross_attention(x, memory, mask, p, heads):
    B, Sq, D = x.shape
    Sk = memory.shape[1]
    q = linear(x.reshape(B * Sq, D), p["wq"], p["bq"]).reshape(B, Sq, D)
    kv = linear(memory.reshape(B * Sk, D), p["w_kv"], p["b_kv"]).reshape(B, Sk, 2 * D)
    k, v = kv[..., :D], kv[..., D:]
    o = attention_bsd(q, k, v, mask, heads)                          # [B, Sq, D]
    return linear(o.reshape(B * Sq, D), p["wo"], p["bo"]).reshape(B, Sq, D)


def feed_forward(x, p):
    B, S, D = x.shape
    h = linear(x.reshape(B * S, D), p["w1"], p["b1"], relu=True)     # w2(relu(w1(x)))
    return linear(h, p["w2"], p["b2"]).reshape(B, S, D)


def ln3d(x, g, b):
    B, S, D = x.shape
    return layernorm(x.reshape(B * S, D), g, b).reshape(B, S, D)


def positional_encoding(max_len, d_model):
    pos = jnp.arange(max_len, dtype=jnp.float32)[:, None]
    div = jnp.exp(jnp.arange(0, d_model, 2, dtype=jnp.float32)
                  * (-math.log(10000.0) / d_model))
    pe = jnp.zeros((max_len, d_model), jnp.float32)
    pe = pe.at[:, 0::2].set(jnp.sin(pos * div))
    pe = pe.at[:, 1::2].set(jnp.cos(pos * div))
    return pe


def embed(tokens, table, pe, d_model):
    # EmbeddingLayer: lut(x) * sqrt(d_model); PositionLayer: + PE (dropout = identity in eval)
    x = jnp.take(table, tokens, axis=0) * math.sqrt(d_model)
    return x + pe[None, : tokens.shape[1], :]


def encode(src_tokens, src_mask, params, cfg):
    x = embed(src_tokens, params["src_emb"], params["pe_src"], cfg["d_model"])
    for lp in params["enc_layers"]:
        xn = ln3d(x, lp["ln1_g"], lp["ln1_b"])
        x = x + multi_head_self_attention(xn, src_mask, lp["self_attn"], cfg["heads"])
        xn = ln3d(x, lp["ln2_g"], lp["ln2_b"])
        x = x + feed_forward(xn, lp["ff"])
    return ln3d(x, params["enc_ln_g"], params["enc_ln_b"])


def decode(memory, src_mask, tgt_tokens, tgt_mask, params, cfg):
    x = embed(tgt_tokens, params["tgt_emb"], params["pe_tgt"], cfg["d_model"])
    for lp in params["dec_layers"]:
        xn = ln3d(x, lp["ln1_g"], lp["ln1_b"])
        x = x + multi_head_self_attention(xn, tgt_mask, lp["self_attn"], cfg["heads"])
        xn = ln3d(x, lp["ln2_g"], lp["ln2_b"])
        x = x + multi_head_cross_attention(xn, memory, src_mask, lp["src_attn"], cfg["heads"])
        xn = ln3d(x, lp["ln3_g"], lp["ln3_b"])
        x = x + feed_forward(xn, lp["ff"])
    return ln3d(x, params["dec_ln_g"], params["dec_ln_b"])


def nmt_transformer_forward(src, tgt, src_mask, tgt_mask, params, cfg):
    """EncoderDecoder forward + LinearSoftmaxGenerator (log-probs over target vocab)."""
    memory = encode(src, src_mask, params, cfg)
    dec = decode(memory, src_mask, tgt, tgt_mask, params, cfg)
    B, T, D = dec.shape
    logp = generator_logprobs(dec.reshape(B * T, D), params["gen_w"], params["gen_b"])
    return logp.reshape(B, T, -1)


# ----------------------------- deterministic parameter init -----------------------------

def xavier_uniform(key, shape):
    fan_in, fan_out = shape[0], shape[1]
    limit = math.sqrt(6.0 / (fan_in + fan_out))
    return jax.random.uniform(key, shape, jnp.float32, -limit, limit)


def init_self_attn_params(key, d):
    ks = jax.random.split(key, 4)
    wq, wk, wv, wo = (xavier_uniform(k, (d, d)) for k in ks)
    z = jnp.zeros((d,), jnp.float32)
    return {"w_qkv": jnp.concatenate([wq, wk, wv], axis=1).astype(jnp.bfloat16),
            "b_qkv": jnp.zeros((3 * d,), jnp.float32),
            "wo": wo.astype(jnp.bfloat16), "bo": z}


def init_cross_attn_params(key, d):
    ks = jax.random.split(key, 4)
    wq, wk, wv, wo = (xavier_uniform(k, (d, d)) for k in ks)
    z = jnp.zeros((d,), jnp.float32)
    return {"wq": wq.astype(jnp.bfloat16), "bq": z,
            "w_kv": jnp.concatenate([wk, wv], axis=1).astype(jnp.bfloat16),
            "b_kv": jnp.zeros((2 * d,), jnp.float32),
            "wo": wo.astype(jnp.bfloat16), "bo": z}


def init_ff_params(key, d, dff):
    k1, k2 = jax.random.split(key)
    return {"w1": xavier_uniform(k1, (d, dff)).astype(jnp.bfloat16),
            "b1": jnp.zeros((dff,), jnp.float32),
            "w2": xavier_uniform(k2, (dff, d)).astype(jnp.bfloat16),
            "b2": jnp.zeros((d,), jnp.float32)}


def init_params(key, cfg):
    d, dff, N = cfg["d_model"], cfg["d_ff"], cfg["layers"]
    ones, zeros = jnp.ones((d,), jnp.float32), jnp.zeros((d,), jnp.float32)
    keys = jax.random.split(key, 2 * N + 3)

    enc_layers = []
    for i in range(N):
        k_attn, k_ff = jax.random.split(keys[i], 2)
        enc_layers.append({"self_attn": init_self_attn_params(k_attn, d),
                           "ff": init_ff_params(k_ff, d, dff),
                           "ln1_g": ones, "ln1_b": zeros,
                           "ln2_g": ones, "ln2_b": zeros})
    dec_layers = []
    for i in range(N):
        k_sa, k_xa, k_ff = jax.random.split(keys[N + i], 3)
        dec_layers.append({"self_attn": init_self_attn_params(k_sa, d),
                           "src_attn": init_cross_attn_params(k_xa, d),
                           "ff": init_ff_params(k_ff, d, dff),
                           "ln1_g": ones, "ln1_b": zeros,
                           "ln2_g": ones, "ln2_b": zeros,
                           "ln3_g": ones, "ln3_b": zeros})
    return {
        "enc_layers": enc_layers, "dec_layers": dec_layers,
        "enc_ln_g": ones, "enc_ln_b": zeros,
        "dec_ln_g": ones, "dec_ln_b": zeros,
        "src_emb": xavier_uniform(keys[2 * N + 0], (cfg["src_vocab"], d)),
        "tgt_emb": xavier_uniform(keys[2 * N + 1], (cfg["tgt_vocab"], d)),
        "gen_w": xavier_uniform(keys[2 * N + 2], (d, cfg["tgt_vocab"])).astype(jnp.bfloat16),
        "gen_b": jnp.zeros((cfg["tgt_vocab"],), jnp.float32),
        "pe_src": positional_encoding(cfg["max_src_pos"], d),
        "pe_tgt": positional_encoding(cfg["max_tgt_pos"], d),
    }


# ----------------------------- demo -----------------------------

if __name__ == "__main__":
    # TODO(synk): dropout layers (p=0.1) are identity here (inference / eval mode).
    # TODO(synk): for very large target vocabularies the fused generator keeps a full
    #             (tm, vocab) logits row-block in VMEM scratch; an online-softmax over
    #             vocab tiles would be needed to tile that dimension as well.
    cfg = dict(src_vocab=12, tgt_vocab=16, layers=2, d_model=32, d_ff=64,
               heads=4, max_src_pos=64, max_tgt_pos=64)

    key = jax.random.PRNGKey(0)
    pkey, skey, tkey = jax.random.split(key, 3)
    params = init_params(pkey, cfg)

    B, S_src, S_tgt = 2, 8, 8
    src = jax.random.randint(skey, (B, S_src), 1, cfg["src_vocab"], dtype=jnp.int32)
    tgt = jax.random.randint(tkey, (B, S_tgt), 1, cfg["tgt_vocab"], dtype=jnp.int32)
    src = src.at[1, -2:].set(0)                                   # some padding

    src_mask = (src != 0)[:, None, :]                             # [B, 1, S_src]
    subsequent = jnp.tril(jnp.ones((S_tgt, S_tgt), jnp.bool_))    # causal mask
    tgt_mask = (tgt != 0)[:, None, :] & subsequent[None, :, :]    # [B, T, T]

    fwd = jax.jit(lambda s, t, sm, tm_, p: nmt_transformer_forward(s, t, sm, tm_, p, cfg))
    out = fwd(src, tgt, src_mask, tgt_mask, params)
    out = jax.block_until_ready(out)

    assert out.shape == (B, S_tgt, cfg["tgt_vocab"])
    assert bool(jnp.all(jnp.isfinite(out)))
    # rows of exp(log_softmax) must sum to 1
    assert bool(jnp.allclose(jnp.sum(jnp.exp(out), axis=-1), 1.0, atol=1e-4))
    print("KERNEL_OK")
</pallas_src>

<mosaic_0001>
module attributes {stable_mosaic.version = 11 : i64} {
  func.func @_layernorm_kernel(%arg0: i32, %arg1: memref<16x32xf32, #tpu.memory_space<vmem>>, %arg2: memref<1x32xf32, #tpu.memory_space<vmem>>, %arg3: memref<1x32xf32, #tpu.memory_space<vmem>>, %arg4: memref<16x32xf32, #tpu.memory_space<vmem>>) attributes {dimension_semantics = [#tpu.dimension_semantics<parallel>], iteration_bounds = array<i64: 1>, scalar_prefetch = 0 : i64, scratch_operands = 0 : i64, tpu.core_type = #tpu.core_type<tc>, window_params = [{transform_indices = @transform_0, window_bounds = array<i64: 16, 32>}, {pipeline_mode = #tpu.pipeline_mode<synchronous>, transform_indices = @transform_1, window_bounds = array<i64: 1, 32>}, {pipeline_mode = #tpu.pipeline_mode<synchronous>, transform_indices = @transform_2, window_bounds = array<i64: 1, 32>}, {transform_indices = @transform_3, window_bounds = array<i64: 16, 32>}]} {
    %c0 = arith.constant 0 : index
    %c0_0 = arith.constant 0 : index
    %0 = vector.load %arg1[%c0, %c0_0] : memref<16x32xf32, #tpu.memory_space<vmem>>, vector<16x32xf32>
    %cst = arith.constant dense<0.000000e+00> : vector<16xf32>
    %1 = vector.multi_reduction <add>, %0, %cst [1] : vector<16x32xf32> to vector<16xf32>
    %2 = vector.shape_cast %1 : vector<16xf32> to vector<16x1xf32>
    %cst_1 = arith.constant 3.200000e+01 : f32
    %3 = vector.broadcast %cst_1 : f32 to vector<16x1xf32>
    %4 = arith.divf %2, %3 : vector<16x1xf32>
    %5 = vector.broadcast %4 : vector<16x1xf32> to vector<16x32xf32>
    %6 = arith.subf %0, %5 : vector<16x32xf32>
    %7 = arith.mulf %6, %6 : vector<16x32xf32>
    %cst_2 = arith.constant dense<0.000000e+00> : vector<16xf32>
    %8 = vector.multi_reduction <add>, %7, %cst_2 [1] : vector<16x32xf32> to vector<16xf32>
    %9 = vector.shape_cast %8 : vector<16xf32> to vector<16x1xf32>
    %cst_3 = arith.constant 0.0322580636 : f32
    %10 = vector.broadcast %cst_3 : f32 to vector<16x1xf32>
    %11 = arith.mulf %9, %10 : vector<16x1xf32>
    %12 = math.sqrt %11 : vector<16x1xf32>
    %c0_4 = arith.constant 0 : index
    %c0_5 = arith.constant 0 : index
    %13 = vector.load %arg2[%c0_4, %c0_5] : memref<1x32xf32, #tpu.memory_space<vmem>>, vector<1x32xf32>
    %14 = vector.broadcast %13 : vector<1x32xf32> to vector<16x32xf32>
    %15 = arith.mulf %14, %6 : vector<16x32xf32>
    %cst_6 = arith.constant 9.99999997E-7 : f32
    %16 = vector.broadcast %cst_6 : f32 to vector<16x1xf32>
    %17 = arith.addf %12, %16 : vector<16x1xf32>
    %18 = vector.broadcast %17 : vector<16x1xf32> to vector<16x32xf32>
    %19 = arith.divf %15, %18 : vector<16x32xf32>
    %c0_7 = arith.constant 0 : index
    %c0_8 = arith.constant 0 : index
    %20 = vector.load %arg3[%c0_7, %c0_8] : memref<1x32xf32, #tpu.memory_space<vmem>>, vector<1x32xf32>
    %21 = vector.broadcast %20 : vector<1x32xf32> to vector<16x32xf32>
    %22 = arith.addf %19, %21 : vector<16x32xf32>
    %c0_9 = arith.constant 0 : index
    %c0_10 = arith.constant 0 : index
    %23 = vector.load %arg4[%c0_9, %c0_10] : memref<16x32xf32, #tpu.memory_space<vmem>>, vector<16x32xf32>
    tpu.vector_store %arg4[%c0_9, %c0_10], %22 {strides = array<i32>} : memref<16x32xf32, #tpu.memory_space<vmem>>, vector<16x32xf32>,
    return
  }
  func.func @transform_0(%arg0: i32) -> (i32, i32) {
    %c0_i32 = arith.constant 0 : i32
    %c0_i32_0 = arith.constant 0 : i32
    return %arg0, %c0_i32 : i32, i32
  }
  func.func @transform_1(%arg0: i32) -> (i32, i32) {
    %c0_i32 = arith.constant 0 : i32
    %c0_i32_0 = arith.constant 0 : i32
    %c0_i32_1 = arith.constant 0 : i32
    return %c0_i32, %c0_i32_0 : i32, i32
  }
  func.func @transform_2(%arg0: i32) -> (i32, i32) {
    %c0_i32 = arith.constant 0 : i32
    %c0_i32_0 = arith.constant 0 : i32
    %c0_i32_1 = arith.constant 0 : i32
    return %c0_i32, %c0_i32_0 : i32, i32
  }
  func.func @transform_3(%arg0: i32) -> (i32, i32) {
    %c0_i32 = arith.constant 0 : i32
    %c0_i32_0 = arith.constant 0 : i32
    return %arg0, %c0_i32 : i32, i32
  }
}

module attributes {stable_mosaic.version = 11 : i64} {
  func.func @_linear_kernel(%arg0: i32, %arg1: i32, %arg2: i32, %arg3: memref<16x32xf32, #tpu.memory_space<vmem>>, %arg4: memref<32x96xbf16, #tpu.memory_space<vmem>>, %arg5: memref<1x96xf32, #tpu.memory_space<vmem>>, %arg6: memref<16x96xf32, #tpu.memory_space<vmem>>, %arg7: memref<16x96xf32, #tpu.memory_space<vmem>>) attributes {dimension_semantics = [#tpu.dimension_semantics<parallel>, #tpu.dimension_semantics<parallel>, #tpu.dimension_semantics<arbitrary>], iteration_bounds = array<i64: 1, 1, 1>, scalar_prefetch = 0 : i64, scratch_operands = 1 : i64, tpu.core_type = #tpu.core_type<tc>, window_params = [{transform_indices = @transform_0, window_bounds = array<i64: 16, 32>}, {transform_indices = @transform_1, window_bounds = array<i64: 32, 96>}, {transform_indices = @transform_2, window_bounds = array<i64: 1, 96>}, {transform_indices = @transform_3, window_bounds = array<i64: 16, 96>}]} {
    %c0_i32 = arith.constant 0 : i32
    %0 = arith.cmpi eq, %arg2, %c0_i32 : i32
    %1 = arith.extui %0 : i1 to i32
    %c0_i32_0 = arith.constant 0 : i32
    %2 = arith.cmpi ne, %1, %c0_i32_0 : i32
    scf.if %2 {
      %cst_10 = arith.constant 0.000000e+00 : f32
      %13 = vector.broadcast %cst_10 : f32 to vector<16x96xf32>
      %c0_11 = arith.constant 0 : index
      %c0_12 = arith.constant 0 : index
      %14 = vector.load %arg7[%c0_11, %c0_12] : memref<16x96xf32, #tpu.memory_space<vmem>>, vector<16x96xf32>
      tpu.vector_store %arg7[%c0_11, %c0_12], %13 {strides = array<i32>} : memref<16x96xf32, #tpu.memory_space<vmem>>, vector<16x96xf32>,
    } else {
    }
    %c0 = arith.constant 0 : index
    %c0_1 = arith.constant 0 : index
    %3 = vector.load %arg7[%c0, %c0_1] : memref<16x96xf32, #tpu.memory_space<vmem>>, vector<16x96xf32>
    %c0_2 = arith.constant 0 : index
    %c0_3 = arith.constant 0 : index
    %4 = vector.load %arg3[%c0_2, %c0_3] : memref<16x32xf32, #tpu.memory_space<vmem>>, vector<16x32xf32>
    %5 = arith.truncf %4 : vector<16x32xf32> to vector<16x32xbf16>
    %c0_4 = arith.constant 0 : index
    %c0_5 = arith.constant 0 : index
    %6 = vector.load %arg4[%c0_4, %c0_5] : memref<32x96xbf16, #tpu.memory_space<vmem>>, vector<32x96xbf16>
    %cst = arith.constant dense<0.000000e+00> : vector<16x96xf32>
    %7 = tpu.matmul %5, %6, %cst {dimension_numbers = #tpu.dot_dimension_numbers<[1], [0], [0], [1], [0, 0, 1, 1], [], []>} : vector<16x32xbf16>, vector<32x96xbf16>, vector<16x96xf32> -> vector<16x96xf32>
    %8 = arith.addf %3, %7 : vector<16x96xf32>
    %c0_6 = arith.constant 0 : index
    %c0_7 = arith.constant 0 : index
    %9 = vector.load %arg7[%c0_6, %c0_7] : memref<16x96xf32, #tpu.memory_space<vmem>>, vector<16x96xf32>
    tpu.vector_store %arg7[%c0_6, %c0_7], %8 {strides = array<i32>} : memref<16x96xf32, #tpu.memory_space<vmem>>, vector<16x96xf32>,
    %c0_i32_8 = arith.constant 0 : i32
    %10 = arith.cmpi eq, %arg2, %c0_i32_8 : i32
    %11 = arith.extui %10 : i1 to i32
    %c0_i32_9 = arith.constant 0 : i32
    %12 = arith.cmpi ne, %11, %c0_i32_9 : i32
    scf.if %12 {
      %c0_10 = arith.constant 0 : index
      %c0_11 = arith.constant 0 : index
      %13 = vector.load %arg7[%c0_10, %c0_11] : memref<16x96xf32, #tpu.memory_space<vmem>>, vector<16x96xf32>
      %c0_12 = arith.constant 0 : index
      %c0_13 = arith.constant 0 : index
      %14 = vector.load %arg5[%c0_12, %c0_13] : memref<1x96xf32, #tpu.memory_space<vmem>>, vector<1x96xf32>
      %15 = vector.broadcast %14 : vector<1x96xf32> to vector<16x96xf32>
      %16 = arith.addf %13, %15 : vector<16x96xf32>
      %c0_14 = arith.constant 0 : index
      %c0_15 = arith.constant 0 : index
      %17 = vector.load %arg6[%c0_14, %c0_15] : memref<16x96xf32, #tpu.memory_space<vmem>>, vector<16x96xf32>
      tpu.vector_store %arg6[%c0_14, %c0_15], %16 {strides = array<i32>} : memref<16x96xf32, #tpu.memory_space<vmem>>, vector<16x96xf32>,
    } else {
    }
    return
  }
  func.func @transform_0(%arg0: i32, %arg1: i32, %arg2: i32) -> (i32, i32) {
    %c0_i32 = arith.constant 0 : i32
    return %arg0, %arg2 : i32, i32
  }
  func.func @transform_1(%arg0: i32, %arg1: i32, %arg2: i32) -> (i32, i32) {
    %c0_i32 = arith.constant 0 : i32
    return %arg2, %arg1 : i32, i32
  }
  func.func @transform_2(%arg0: i32, %arg1: i32, %arg2: i32) -> (i32, i32) {
    %c0_i32 = arith.constant 0 : i32
    %c0_i32_0 = arith.constant 0 : i32
    return %c0_i32, %arg1 : i32, i32
  }
  func.func @transform_3(%arg0: i32, %arg1: i32, %arg2: i32) -> (i32, i32) {
    %c0_i32 = arith.constant 0 : i32
    return %arg0, %arg1 : i32, i32
  }
}

module attributes {stable_mosaic.version = 11 : i64} {
  func.func @_linear_kernel(%arg0: i32, %arg1: i32, %arg2: i32, %arg3: memref<16x32xf32, #tpu.memory_space<vmem>>, %arg4: memref<32x32xbf16, #tpu.memory_space<vmem>>, %arg5: memref<1x32xf32, #tpu.memory_space<vmem>>, %arg6: memref<16x32xf32, #tpu.memory_space<vmem>>, %arg7: memref<16x32xf32, #tpu.memory_space<vmem>>) attributes {dimension_semantics = [#tpu.dimension_semantics<parallel>, #tpu.dimension_semantics<parallel>, #tpu.dimension_semantics<arbitrary>], iteration_bounds = array<i64: 1, 1, 1>, scalar_prefetch = 0 : i64, scratch_operands = 1 : i64, tpu.core_type = #tpu.core_type<tc>, window_params = [{transform_indices = @transform_0, window_bounds = array<i64: 16, 32>}, {transform_indices = @transform_1, window_bounds = array<i64: 32, 32>}, {transform_indices = @transform_2, window_bounds = array<i64: 1, 32>}, {transform_indices = @transform_3, window_bounds = array<i64: 16, 32>}]} {
    %c0_i32 = arith.constant 0 : i32
    %0 = arith.cmpi eq, %arg2, %c0_i32 : i32
    %1 = arith.extui %0 : i1 to i32
    %c0_i32_0 = arith.constant 0 : i32
    %2 = arith.cmpi ne, %1, %c0_i32_0 : i32
    scf.if %2 {
      %cst_10 = arith.constant 0.000000e+00 : f32
      %13 = vector.broadcast %cst_10 : f32 to vector<16x32xf32>
      %c0_11 = arith.constant 0 : index
      %c0_12 = arith.constant 0 : index
      %14 = vector.load %arg7[%c0_11, %c0_12] : memref<16x32xf32, #tpu.memory_space<vmem>>, vector<16x32xf32>
      tpu.vector_store %arg7[%c0_11, %c0_12], %13 {strides = array<i32>} : memref<16x32xf32, #tpu.memory_space<vmem>>, vector<16x32xf32>,
    } else {
    }
    %c0 = arith.constant 0 : index
    %c0_1 = arith.constant 0 : index
    %3 = vector.load %arg7[%c0, %c0_1] : memref<16x32xf32, #tpu.memory_space<vmem>>, vector<16x32xf32>
    %c0_2 = arith.constant 0 : index
    %c0_3 = arith.constant 0 : index
    %4 = vector.load %arg3[%c0_2, %c0_3] : memref<16x32xf32, #tpu.memory_space<vmem>>, vector<16x32xf32>
    %5 = arith.truncf %4 : vector<16x32xf32> to vector<16x32xbf16>
    %c0_4 = arith.constant 0 : index
    %c0_5 = arith.constant 0 : index
    %6 = vector.load %arg4[%c0_4, %c0_5] : memref<32x32xbf16, #tpu.memory_space<vmem>>, vector<32x32xbf16>
    %cst = arith.constant dense<0.000000e+00> : vector<16x32xf32>
    %7 = tpu.matmul %5, %6, %cst {dimension_numbers = #tpu.dot_dimension_numbers<[1], [0], [0], [1], [0, 0, 1, 1], [], []>} : vector<16x32xbf16>, vector<32x32xbf16>, vector<16x32xf32> -> vector<16x32xf32>
    %8 = arith.addf %3, %7 : vector<16x32xf32>
    %c0_6 = arith.constant 0 : index
    %c0_7 = arith.constant 0 : index
    %9 = vector.load %arg7[%c0_6, %c0_7] : memref<16x32xf32, #tpu.memory_space<vmem>>, vector<16x32xf32>
    tpu.vector_store %arg7[%c0_6, %c0_7], %8 {strides = array<i32>} : memref<16x32xf32, #tpu.memory_space<vmem>>, vector<16x32xf32>,
    %c0_i32_8 = arith.constant 0 : i32
    %10 = arith.cmpi eq, %arg2, %c0_i32_8 : i32
    %11 = arith.extui %10 : i1 to i32
    %c0_i32_9 = arith.constant 0 : i32
    %12 = arith.cmpi ne, %11, %c0_i32_9 : i32
    scf.if %12 {
      %c0_10 = arith.constant 0 : index
      %c0_11 = arith.constant 0 : index
      %13 = vector.load %arg7[%c0_10, %c0_11] : memref<16x32xf32, #tpu.memory_space<vmem>>, vector<16x32xf32>
      %c0_12 = arith.constant 0 : index
      %c0_13 = arith.constant 0 : index
      %14 = vector.load %arg5[%c0_12, %c0_13] : memref<1x32xf32, #tpu.memory_space<vmem>>, vector<1x32xf32>
      %15 = vector.broadcast %14 : vector<1x32xf32> to vector<16x32xf32>
      %16 = arith.addf %13, %15 : vector<16x32xf32>
      %c0_14 = arith.constant 0 : index
      %c0_15 = arith.constant 0 : index
      %17 = vector.load %arg6[%c0_14, %c0_15] : memref<16x32xf32, #tpu.memory_space<vmem>>, vector<16x32xf32>
      tpu.vector_store %arg6[%c0_14, %c0_15], %16 {strides = array<i32>} : memref<16x32xf32, #tpu.memory_space<vmem>>, vector<16x32xf32>,
    } else {
    }
    return
  }
  func.func @transform_0(%arg0: i32, %arg1: i32, %arg2: i32) -> (i32, i32) {
    %c0_i32 = arith.constant 0 : i32
    return %arg0, %arg2 : i32, i32
  }
  func.func @transform_1(%arg0: i32, %arg1: i32, %arg2: i32) -> (i32, i32) {
    %c0_i32 = arith.constant 0 : i32
    return %arg2, %arg1 : i32, i32
  }
  func.func @transform_2(%arg0: i32, %arg1: i32, %arg2: i32) -> (i32, i32) {
    %c0_i32 = arith.constant 0 : i32
    %c0_i32_0 = arith.constant 0 : i32
    return %c0_i32, %arg1 : i32, i32
  }
  func.func @transform_3(%arg0: i32, %arg1: i32, %arg2: i32) -> (i32, i32) {
    %c0_i32 = arith.constant 0 : i32
    return %arg0, %arg1 : i32, i32
  }
}

module attributes {stable_mosaic.version = 11 : i64} {
  func.func @_mha_kernel(%arg0: i32, %arg1: memref<1x8x32xf32, #tpu.memory_space<vmem>>, %arg2: memref<1x8x32xf32, #tpu.memory_space<vmem>>, %arg3: memref<1x8x32xf32, #tpu.memory_space<vmem>>, %arg4: memref<1x8x8xi8, #tpu.memory_space<vmem>>, %arg5: memref<1x8x32xf32, #tpu.memory_space<vmem>>) attributes {dimension_semantics = [#tpu.dimension_semantics<parallel>], iteration_bounds = array<i64: 2>, scalar_prefetch = 0 : i64, scratch_operands = 0 : i64, tpu.core_type = #tpu.core_type<tc>, window_params = [{transform_indices = @transform_0, window_bounds = array<i64: 1, 8, 32>}, {transform_indices = @transform_1, window_bounds = array<i64: 1, 8, 32>}, {transform_indices = @transform_2, window_bounds = array<i64: 1, 8, 32>}, {transform_indices = @transform_3, window_bounds = array<i64: 1, 8, 8>}, {transform_indices = @transform_4, window_bounds = array<i64: 1, 8, 32>}]} {
    %c0 = arith.constant 0 : index
    %c0_0 = arith.constant 0 : index
    %c0_1 = arith.constant 0 : index
    %0 = vector.load %arg1[%c0, %c0_0, %c0_1] : memref<1x8x32xf32, #tpu.memory_space<vmem>>, vector<1x8x32xf32>
    %1 = vector.shape_cast %0 : vector<1x8x32xf32> to vector<8x32xf32>
    %c0_2 = arith.constant 0 : index
    %c0_3 = arith.constant 0 : index
    %c0_4 = arith.constant 0 : index
    %2 = vector.load %arg2[%c0_2, %c0_3, %c0_4] : memref<1x8x32xf32, #tpu.memory_space<vmem>>, vector<1x8x32xf32>
    %3 = vector.shape_cast %2 : vector<1x8x32xf32> to vector<8x32xf32>
    %c0_5 = arith.constant 0 : index
    %c0_6 = arith.constant 0 : index
    %c0_7 = arith.constant 0 : index
    %4 = vector.load %arg3[%c0_5, %c0_6, %c0_7] : memref<1x8x32xf32, #tpu.memory_space<vmem>>, vector<1x8x32xf32>
    %5 = vector.shape_cast %4 : vector<1x8x32xf32> to vector<8x32xf32>
    %c0_8 = arith.constant 0 : index
    %c0_9 = arith.constant 0 : index
    %c0_10 = arith.constant 0 : index
    %6 = vector.load %arg4[%c0_8, %c0_9, %c0_10] : memref<1x8x8xi8, #tpu.memory_space<vmem>>, vector<1x8x8xi8>
    %7 = vector.shape_cast %6 : vector<1x8x8xi8> to vector<8x8xi8>
    %8 = arith.sitofp %7 : vector<8x8xi8> to vector<8x8xf32>
    %9 = vector.extract_strided_slice %1 {offsets = [0, 0], sizes = [8, 8], strides = [1, 1]} : vector<8x32xf32> to vector<8x8xf32>
    %10 = arith.truncf %9 : vector<8x8xf32> to vector<8x8xbf16>
    %11 = vector.extract_strided_slice %3 {offsets = [0, 0], sizes = [8, 8], strides = [1, 1]} : vector<8x32xf32> to vector<8x8xf32>
    %12 = arith.truncf %11 : vector<8x8xf32> to vector<8x8xbf16>
    %13 = vector.extract_strided_slice %5 {offsets = [0, 0], sizes = [8, 8], strides = [1, 1]} : vector<8x32xf32> to vector<8x8xf32>
    %14 = arith.truncf %13 : vector<8x8xf32> to vector<8x8xbf16>
    %cst = arith.constant dense<0.000000e+00> : vector<8x8xf32>
    %15 = tpu.matmul %10, %12, %cst {dimension_numbers = #tpu.dot_dimension_numbers<[1], [1], [0], [0], [0, 0, 1, 0], [], []>} : vector<8x8xbf16>, vector<8x8xbf16>, vector<8x8xf32> -> vector<8x8xf32>
    %cst_11 = arith.constant 0.353553385 : f32
    %16 = vector.broadcast %cst_11 : f32 to vector<8x8xf32>
    %17 = arith.mulf %15, %16 : vector<8x8xf32>
    %cst_12 = arith.constant 0.000000e+00 : f32
    %18 = vector.broadcast %cst_12 : f32 to vector<8x8xf32>
    %19 = arith.cmpf oeq, %8, %18 : vector<8x8xf32>
    %cst_13 = arith.constant -1.000000e+09 : f32
    %20 = vector.broadcast %cst_13 : f32 to vector<8x8xf32>
    %21 = arith.select %19, %20, %17 : vector<8x8xi1>, vector<8x8xf32>
    %cst_14 = arith.constant dense<0xFF800000> : vector<8xf32>
    %22 = vector.multi_reduction <maximumf>, %21, %cst_14 [1] : vector<8x8xf32> to vector<8xf32>
    %23 = vector.shape_cast %22 : vector<8xf32> to vector<8x1xf32>
    %24 = vector.broadcast %23 : vector<8x1xf32> to vector<8x8xf32>
    %25 = arith.subf %21, %24 : vector<8x8xf32>
    %26 = math.exp %25 : vector<8x8xf32>
    %cst_15 = arith.constant dense<0.000000e+00> : vector<8xf32>
    %27 = vector.multi_reduction <add>, %26, %cst_15 [1] : vector<8x8xf32> to vector<8xf32>
    %28 = vector.shape_cast %27 : vector<8xf32> to vector<8x1xf32>
    %29 = tpu.reciprocal %28 {approx = true} : vector<8x1xf32> -> vector<8x1xf32>
    %30 = vector.broadcast %29 : vector<8x1xf32> to vector<8x8xf32>
    %31 = arith.mulf %26, %30 : vector<8x8xf32>
    %32 = arith.truncf %31 : vector<8x8xf32> to vector<8x8xbf16>
    %cst_16 = arith.constant dense<0.000000e+00> : vector<8x8xf32>
    %33 = tpu.matmul %32, %14, %cst_16 {dimension_numbers = #tpu.dot_dimension_numbers<[1], [0], [0], [1], [0, 0, 1, 1], [], []>} : vector<8x8xbf16>, vector<8x8xbf16>, vector<8x8xf32> -> vector<8x8xf32>
    %34 = vector.extract_strided_slice %1 {offsets = [0, 8], sizes = [8, 8], strides = [1, 1]} : vector<8x32xf32> to vector<8x8xf32>
    %35 = arith.truncf %34 : vector<8x8xf32> to vector<8x8xbf16>
    %36 = vector.extract_strided_slice %3 {offsets = [0, 8], sizes = [8, 8], strides = [1, 1]} : vector<8x32xf32> to vector<8x8xf32>
    %37 = arith.truncf %36 : vector<8x8xf32> to vector<8x8xbf16>
    %38 = vector.extract_strided_slice %5 {offsets = [0, 8], sizes = [8, 8], strides = [1, 1]} : vector<8x32xf32> to vector<8x8xf32>
    %39 = arith.truncf %38 : vector<8x8xf32> to vector<8x8xbf16>
    %cst_17 = arith.constant dense<0.000000e+00> : vector<8x8xf32>
    %40 = tpu.matmul %35, %37, %cst_17 {dimension_numbers = #tpu.dot_dimension_numbers<[1], [1], [0], [0], [0, 0, 1, 0], [], []>} : vector<8x8xbf16>, vector<8x8xbf16>, vector<8x8xf32> -> vector<8x8xf32>
    %cst_18 = arith.constant 0.353553385 : f32
    %41 = vector.broadcast %cst_18 : f32 to vector<8x8xf32>
    %42 = arith.mulf %40, %41 : vector<8x8xf32>
    %cst_19 = arith.constant 0.000000e+00 : f32
    %43 = vector.broadcast %cst_19 : f32 to vector<8x8xf32>
    %44 = arith.cmpf oeq, %8, %43 : vector<8x8xf32>
    %cst_20 = arith.constant -1.000000e+09 : f32
    %45 = vector.broadcast %cst_20 : f32 to vector<8x8xf32>
    %46 = arith.select %44, %45, %42 : vector<8x8xi1>, vector<8x8xf32>
    %cst_21 = arith.constant dense<0xFF800000> : vector<8xf32>
    %47 = vector.multi_reduction <maximumf>, %46, %cst_21 [1] : vector<8x8xf32> to vector<8xf32>
    %48 = vector.shape_cast %47 : vector<8xf32> to vector<8x1xf32>
    %49 = vector.broadcast %48 : vector<8x1xf32> to vector<8x8xf32>
    %50 = arith.subf %46, %49 : vector<8x8xf32>
    %51 = math.exp %50 : vector<8x8xf32>
    %cst_22 = arith.constant dense<0.000000e+00> : vector<8xf32>
    %52 = vector.multi_reduction <add>, %51, %cst_22 [1] : vector<8x8xf32> to vector<8xf32>
    %53 = vector.shape_cast %52 : vector<8xf32> to vector<8x1xf32>
    %54 = tpu.reciprocal %53 {approx = true} : vector<8x1xf32> -> vector<8x1xf32>
    %55 = vector.broadcast %54 : vector<8x1xf32> to vector<8x8xf32>
    %56 = arith.mulf %51, %55 : vector<8x8xf32>
    %57 = arith.truncf %56 : vector<8x8xf32> to vector<8x8xbf16>
    %cst_23 = arith.constant dense<0.000000e+00> : vector<8x8xf32>
    %58 = tpu.matmul %57, %39, %cst_23 {dimension_numbers = #tpu.dot_dimension_numbers<[1], [0], [0], [1], [0, 0, 1, 1], [], []>} : vector<8x8xbf16>, vector<8x8xbf16>, vector<8x8xf32> -> vector<8x8xf32>
    %59 = vector.extract_strided_slice %1 {offsets = [0, 16], sizes = [8, 8], strides = [1, 1]} : vector<8x32xf32> to vector<8x8xf32>
    %60 = arith.truncf %59 : vector<8x8xf32> to vector<8x8xbf16>
    %61 = vector.extract_strided_slice %3 {offsets = [0, 16], sizes = [8, 8], strides = [1, 1]} : vector<8x32xf32> to vector<8x8xf32>
    %62 = arith.truncf %61 : vector<8x8xf32> to vector<8x8xbf16>
    %63 = vector.extract_strided_slice %5 {offsets = [0, 16], sizes = [8, 8], strides = [1, 1]} : vector<8x32xf32> to vector<8x8xf32>
    %64 = arith.truncf %63 : vector<8x8xf32> to vector<8x8xbf16>
    %cst_24 = arith.constant dense<0.000000e+00> : vector<8x8xf32>
    %65 = tpu.matmul %60, %62, %cst_24 {dimension_numbers = #tpu.dot_dimension_numbers<[1], [1], [0], [0], [0, 0, 1, 0], [], []>} : vector<8x8xbf16>, vector<8x8xbf16>, vector<8x8xf32> -> vector<8x8xf32>
    %cst_25 = arith.constant 0.353553385 : f32
    %66 = vector.broadcast %cst_25 : f32 to vector<8x8xf32>
    %67 = arith.mulf %65, %66 : vector<8x8xf32>
    %cst_26 = arith.constant 0.000000e+00 : f32
    %68 = vector.broadcast %cst_26 : f32 to vector<8x8xf32>
    %69 = arith.cmpf oeq, %8, %68 : vector<8x8xf32>
    %cst_27 = arith.constant -1.000000e+09 : f32
    %70 = vector.broadcast %cst_27 : f32 to vector<8x8xf32>
    %71 = arith.select %69, %70, %67 : vector<8x8xi1>, vector<8x8xf32>
    %cst_28 = arith.constant dense<0xFF800000> : vector<8xf32>
    %72 = vector.multi_reduction <maximumf>, %71, %cst_28 [1] : vector<8x8xf32> to vector<8xf32>
    %73 = vector.shape_cast %72 : vector<8xf32> to vector<8x1xf32>
    %74 = vector.broadcast %73 : vector<8x1xf32> to vector<8x8xf32>
    %75 = arith.subf %71, %74 : vector<8x8xf32>
    %76 = math.exp %75 : vector<8x8xf32>
    %cst_29 = arith.constant dense<0.000000e+00> : vector<8xf32>
    %77 = vector.multi_reduction <add>, %76, %cst_29 [1] : vector<8x8xf32> to vector<8xf32>
    %78 = vector.shape_cast %77 : vector<8xf32> to vector<8x1xf32>
    %79 = tpu.reciprocal %78 {approx = true} : vector<8x1xf32> -> vector<8x1xf32>
    %80 = vector.broadcast %79 : vector<8x1xf32> to vector<8x8xf32>
    %81 = arith.mulf %76, %80 : vector<8x8xf32>
    %82 = arith.truncf %81 : vector<8x8xf32> to vector<8x8xbf16>
    %cst_30 = arith.constant dense<0.000000e+00> : vector<8x8xf32>
    %83 = tpu.matmul %82, %64, %cst_30 {dimension_numbers = #tpu.dot_dimension_numbers<[1], [0], [0], [1], [0, 0, 1, 1], [], []>} : vector<8x8xbf16>, vector<8x8xbf16>, vector<8x8xf32> -> vector<8x8xf32>
    %84 = vector.extract_strided_slice %1 {offsets = [0, 24], sizes = [8, 8], strides = [1, 1]} : vector<8x32xf32> to vector<8x8xf32>
    %85 = arith.truncf %84 : vector<8x8xf32> to vector<8x8xbf16>
    %86 = vector.extract_strided_slice %3 {offsets = [0, 24], sizes = [8, 8], strides = [1, 1]} : vector<8x32xf32> to vector<8x8xf32>
    %87 = arith.truncf %86 : vector<8x8xf32> to vector<8x8xbf16>
    %88 = vector.extract_strided_slice %5 {offsets = [0, 24], sizes = [8, 8], strides = [1, 1]} : vector<8x32xf32> to vector<8x8xf32>
    %89 = arith.truncf %88 : vector<8x8xf32> to vector<8x8xbf16>
    %cst_31 = arith.constant dense<0.000000e+00> : vector<8x8xf32>
    %90 = tpu.matmul %85, %87, %cst_31 {dimension_numbers = #tpu.dot_dimension_numbers<[1], [1], [0], [0], [0, 0, 1, 0], [], []>} : vector<8x8xbf16>, vector<8x8xbf16>, vector<8x8xf32> -> vector<8x8xf32>
    %cst_32 = arith.constant 0.353553385 : f32
    %91 = vector.broadcast %cst_32 : f32 to vector<8x8xf32>
    %92 = arith.mulf %90, %91 : vector<8x8xf32>
    %cst_33 = arith.constant 0.000000e+00 : f32
    %93 = vector.broadcast %cst_33 : f32 to vector<8x8xf32>
    %94 = arith.cmpf oeq, %8, %93 : vector<8x8xf32>
    %cst_34 = arith.constant -1.000000e+09 : f32
    %95 = vector.broadcast %cst_34 : f32 to vector<8x8xf32>
    %96 = arith.select %94, %95, %92 : vector<8x8xi1>, vector<8x8xf32>
    %cst_35 = arith.constant dense<0xFF800000> : vector<8xf32>
    %97 = vector.multi_reduction <maximumf>, %96, %cst_35 [1] : vector<8x8xf32> to vector<8xf32>
    %98 = vector.shape_cast %97 : vector<8xf32> to vector<8x1xf32>
    %99 = vector.broadcast %98 : vector<8x1xf32> to vector<8x8xf32>
    %100 = arith.subf %96, %99 : vector<8x8xf32>
    %101 = math.exp %100 : vector<8x8xf32>
    %cst_36 = arith.constant dense<0.000000e+00> : vector<8xf32>
    %102 = vector.multi_reduction <add>, %101, %cst_36 [1] : vector<8x8xf32> to vector<8xf32>
    %103 = vector.shape_cast %102 : vector<8xf32> to vector<8x1xf32>
    %104 = tpu.reciprocal %103 {approx = true} : vector<8x1xf32> -> vector<8x1xf32>
    %105 = vector.broadcast %104 : vector<8x1xf32> to vector<8x8xf32>
    %106 = arith.mulf %101, %105 : vector<8x8xf32>
    %107 = arith.truncf %106 : vector<8x8xf32> to vector<8x8xbf16>
    %cst_37 = arith.constant dense<0.000000e+00> : vector<8x8xf32>
    %108 = tpu.matmul %107, %89, %cst_37 {dimension_numbers = #tpu.dot_dimension_numbers<[1], [0], [0], [1], [0, 0, 1, 1], [], []>} : vector<8x8xbf16>, vector<8x8xbf16>, vector<8x8xf32> -> vector<8x8xf32>
    %109 = tpu.concatenate %33, %58, %83, %108 in 1 : vector<8x8xf32>, vector<8x8xf32>, vector<8x8xf32>, vector<8x8xf32> -> vector<8x32xf32>
    %c0_38 = arith.constant 0 : index
    %c0_39 = arith.constant 0 : index
    %c0_40 = arith.constant 0 : index
    %110 = vector.load %arg5[%c0_38, %c0_39, %c0_40] : memref<1x8x32xf32, #tpu.memory_space<vmem>>, vector<1x8x32xf32>
    %111 = vector.shape_cast %110 : vector<1x8x32xf32> to vector<8x32xf32>
    %112 = vector.shape_cast %109 : vector<8x32xf32> to vector<1x8x32xf32>
    tpu.vector_store %arg5[%c0_38, %c0_39, %c0_40], %112 {strides = array<i32>} : memref<1x8x32xf32, #tpu.memory_space<vmem>>, vector<1x8x32xf32>,
    return
  }
  func.func @transform_0(%arg0: i32) -> (i32, i32, i32) {
    %c0_i32 = arith.constant 0 : i32
    %c0_i32_0 = arith.constant 0 : i32
    %c0_i32_1 = arith.constant 0 : i32
    return %arg0, %c0_i32, %c0_i32_0 : i32, i32, i32
  }
  func.func @transform_1(%arg0: i32) -> (i32, i32, i32) {
    %c0_i32 = arith.constant 0 : i32
    %c0_i32_0 = arith.constant 0 : i32
    %c0_i32_1 = arith.constant 0 : i32
    return %arg0, %c0_i32, %c0_i32_0 : i32, i32, i32
  }
  func.func @transform_2(%arg0: i32) -> (i32, i32, i32) {
    %c0_i32 = arith.constant 0 : i32
    %c0_i32_0 = arith.constant 0 : i32
    %c0_i32_1 = arith.constant 0 : i32
    return %arg0, %c0_i32, %c0_i32_0 : i32, i32, i32
  }
  func.func @transform_3(%arg0: i32) -> (i32, i32, i32) {
    %c0_i32 = arith.constant 0 : i32
    %c0_i32_0 = arith.constant 0 : i32
    %c0_i32_1 = arith.constant 0 : i32
    return %arg0, %c0_i32, %c0_i32_0 : i32, i32, i32
  }
  func.func @transform_4(%arg0: i32) -> (i32, i32, i32) {
    %c0_i32 = arith.constant 0 : i32
    %c0_i32_0 = arith.constant 0 : i32
    %c0_i32_1 = arith.constant 0 : i32
    return %arg0, %c0_i32, %c0_i32_0 : i32, i32, i32
  }
}

module attributes {stable_mosaic.version = 11 : i64} {
  func.func @_linear_kernel(%arg0: i32, %arg1: i32, %arg2: i32, %arg3: memref<16x32xf32, #tpu.memory_space<vmem>>, %arg4: memref<32x64xbf16, #tpu.memory_space<vmem>>, %arg5: memref<1x64xf32, #tpu.memory_space<vmem>>, %arg6: memref<16x64xf32, #tpu.memory_space<vmem>>, %arg7: memref<16x64xf32, #tpu.memory_space<vmem>>) attributes {dimension_semantics = [#tpu.dimension_semantics<parallel>, #tpu.dimension_semantics<parallel>, #tpu.dimension_semantics<arbitrary>], iteration_bounds = array<i64: 1, 1, 1>, scalar_prefetch = 0 : i64, scratch_operands = 1 : i64, tpu.core_type = #tpu.core_type<tc>, window_params = [{transform_indices = @transform_0, window_bounds = array<i64: 16, 32>}, {transform_indices = @transform_1, window_bounds = array<i64: 32, 64>}, {transform_indices = @transform_2, window_bounds = array<i64: 1, 64>}, {transform_indices = @transform_3, window_bounds = array<i64: 16, 64>}]} {
    %c0_i32 = arith.constant 0 : i32
    %0 = arith.cmpi eq, %arg2, %c0_i32 : i32
    %1 = arith.extui %0 : i1 to i32
    %c0_i32_0 = arith.constant 0 : i32
    %2 = arith.cmpi ne, %1, %c0_i32_0 : i32
    scf.if %2 {
      %cst_10 = arith.constant 0.000000e+00 : f32
      %13 = vector.broadcast %cst_10 : f32 to vector<16x64xf32>
      %c0_11 = arith.constant 0 : index
      %c0_12 = arith.constant 0 : index
      %14 = vector.load %arg7[%c0_11, %c0_12] : memref<16x64xf32, #tpu.memory_space<vmem>>, vector<16x64xf32>
      tpu.vector_store %arg7[%c0_11, %c0_12], %13 {strides = array<i32>} : memref<16x64xf32, #tpu.memory_space<vmem>>, vector<16x64xf32>,
    } else {
    }
    %c0 = arith.constant 0 : index
    %c0_1 = arith.constant 0 : index
    %3 = vector.load %arg7[%c0, %c0_1] : memref<16x64xf32, #tpu.memory_space<vmem>>, vector<16x64xf32>
    %c0_2 = arith.constant 0 : index
    %c0_3 = arith.constant 0 : index
    %4 = vector.load %arg3[%c0_2, %c0_3] : memref<16x32xf32, #tpu.memory_space<vmem>>, vector<16x32xf32>
    %5 = arith.truncf %4 : vector<16x32xf32> to vector<16x32xbf16>
    %c0_4 = arith.constant 0 : index
    %c0_5 = arith.constant 0 : index
    %6 = vector.load %arg4[%c0_4, %c0_5] : memref<32x64xbf16, #tpu.memory_space<vmem>>, vector<32x64xbf16>
    %cst = arith.constant dense<0.000000e+00> : vector<16x64xf32>
    %7 = tpu.matmul %5, %6, %cst {dimension_numbers = #tpu.dot_dimension_numbers<[1], [0], [0], [1], [0, 0, 1, 1], [], []>} : vector<16x32xbf16>, vector<32x64xbf16>, vector<16x64xf32> -> vector<16x64xf32>
    %8 = arith.addf %3, %7 : vector<16x64xf32>
    %c0_6 = arith.constant 0 : index
    %c0_7 = arith.constant 0 : index
    %9 = vector.load %arg7[%c0_6, %c0_7] : memref<16x64xf32, #tpu.memory_space<vmem>>, vector<16x64xf32>
    tpu.vector_store %arg7[%c0_6, %c0_7], %8 {strides = array<i32>} : memref<16x64xf32, #tpu.memory_space<vmem>>, vector<16x64xf32>,
    %c0_i32_8 = arith.constant 0 : i32
    %10 = arith.cmpi eq, %arg2, %c0_i32_8 : i32
    %11 = arith.extui %10 : i1 to i32
    %c0_i32_9 = arith.constant 0 : i32
    %12 = arith.cmpi ne, %11, %c0_i32_9 : i32
    scf.if %12 {
      %c0_10 = arith.constant 0 : index
      %c0_11 = arith.constant 0 : index
      %13 = vector.load %arg7[%c0_10, %c0_11] : memref<16x64xf32, #tpu.memory_space<vmem>>, vector<16x64xf32>
      %c0_12 = arith.constant 0 : index
      %c0_13 = arith.constant 0 : index
      %14 = vector.load %arg5[%c0_12, %c0_13] : memref<1x64xf32, #tpu.memory_space<vmem>>, vector<1x64xf32>
      %15 = vector.broadcast %14 : vector<1x64xf32> to vector<16x64xf32>
      %16 = arith.addf %13, %15 : vector<16x64xf32>
      %cst_14 = arith.constant 0.000000e+00 : f32
      %17 = vector.broadcast %cst_14 : f32 to vector<16x64xf32>
      %18 = arith.maximumf %16, %17 : vector<16x64xf32>
      %c0_15 = arith.constant 0 : index
      %c0_16 = arith.constant 0 : index
      %19 = vector.load %arg6[%c0_15, %c0_16] : memref<16x64xf32, #tpu.memory_space<vmem>>, vector<16x64xf32>
      tpu.vector_store %arg6[%c0_15, %c0_16], %18 {strides = array<i32>} : memref<16x64xf32, #tpu.memory_space<vmem>>, vector<16x64xf32>,
    } else {
    }
    return
  }
  func.func @transform_0(%arg0: i32, %arg1: i32, %arg2: i32) -> (i32, i32) {
    %c0_i32 = arith.constant 0 : i32
    return %arg0, %arg2 : i32, i32
  }
  func.func @transform_1(%arg0: i32, %arg1: i32, %arg2: i32) -> (i32, i32) {
    %c0_i32 = arith.constant 0 : i32
    return %arg2, %arg1 : i32, i32
  }
  func.func @transform_2(%arg0: i32, %arg1: i32, %arg2: i32) -> (i32, i32) {
    %c0_i32 = arith.constant 0 : i32
    %c0_i32_0 = arith.constant 0 : i32
    return %c0_i32, %arg1 : i32, i32
  }
  func.func @transform_3(%arg0: i32, %arg1: i32, %arg2: i32) -> (i32, i32) {
    %c0_i32 = arith.constant 0 : i32
    return %arg0, %arg1 : i32, i32
  }
}

module attributes {stable_mosaic.version = 11 : i64} {
  func.func @_linear_kernel(%arg0: i32, %arg1: i32, %arg2: i32, %arg3: memref<16x64xf32, #tpu.memory_space<vmem>>, %arg4: memref<64x32xbf16, #tpu.memory_space<vmem>>, %arg5: memref<1x32xf32, #tpu.memory_space<vmem>>, %arg6: memref<16x32xf32, #tpu.memory_space<vmem>>, %arg7: memref<16x32xf32, #tpu.memory_space<vmem>>) attributes {dimension_semantics = [#tpu.dimension_semantics<parallel>, #tpu.dimension_semantics<parallel>, #tpu.dimension_semantics<arbitrary>], iteration_bounds = array<i64: 1, 1, 1>, scalar_prefetch = 0 : i64, scratch_operands = 1 : i64, tpu.core_type = #tpu.core_type<tc>, window_params = [{transform_indices = @transform_0, window_bounds = array<i64: 16, 64>}, {transform_indices = @transform_1, window_bounds = array<i64: 64, 32>}, {transform_indices = @transform_2, window_bounds = array<i64: 1, 32>}, {transform_indices = @transform_3, window_bounds = array<i64: 16, 32>}]} {
    %c0_i32 = arith.constant 0 : i32
    %0 = arith.cmpi eq, %arg2, %c0_i32 : i32
    %1 = arith.extui %0 : i1 to i32
    %c0_i32_0 = arith.constant 0 : i32
    %2 = arith.cmpi ne, %1, %c0_i32_0 : i32
    scf.if %2 {
      %cst_10 = arith.constant 0.000000e+00 : f32
      %13 = vector.broadcast %cst_10 : f32 to vector<16x32xf32>
      %c0_11 = arith.constant 0 : index
      %c0_12 = arith.constant 0 : index
      %14 = vector.load %arg7[%c0_11, %c0_12] : memref<16x32xf32, #tpu.memory_space<vmem>>, vector<16x32xf32>
      tpu.vector_store %arg7[%c0_11, %c0_12], %13 {strides = array<i32>} : memref<16x32xf32, #tpu.memory_space<vmem>>, vector<16x32xf32>,
    } else {
    }
    %c0 = arith.constant 0 : index
    %c0_1 = arith.constant 0 : index
    %3 = vector.load %arg7[%c0, %c0_1] : memref<16x32xf32, #tpu.memory_space<vmem>>, vector<16x32xf32>
    %c0_2 = arith.constant 0 : index
    %c0_3 = arith.constant 0 : index
    %4 = vector.load %arg3[%c0_2, %c0_3] : memref<16x64xf32, #tpu.memory_space<vmem>>, vector<16x64xf32>
    %5 = arith.truncf %4 : vector<16x64xf32> to vector<16x64xbf16>
    %c0_4 = arith.constant 0 : index
    %c0_5 = arith.constant 0 : index
    %6 = vector.load %arg4[%c0_4, %c0_5] : memref<64x32xbf16, #tpu.memory_space<vmem>>, vector<64x32xbf16>
    %cst = arith.constant dense<0.000000e+00> : vector<16x32xf32>
    %7 = tpu.matmul %5, %6, %cst {dimension_numbers = #tpu.dot_dimension_numbers<[1], [0], [0], [1], [0, 0, 1, 1], [], []>} : vector<16x64xbf16>, vector<64x32xbf16>, vector<16x32xf32> -> vector<16x32xf32>
    %8 = arith.addf %3, %7 : vector<16x32xf32>
    %c0_6 = arith.constant 0 : index
    %c0_7 = arith.constant 0 : index
    %9 = vector.load %arg7[%c0_6, %c0_7] : memref<16x32xf32, #tpu.memory_space<vmem>>, vector<16x32xf32>
    tpu.vector_store %arg7[%c0_6, %c0_7], %8 {strides = array<i32>} : memref<16x32xf32, #tpu.memory_space<vmem>>, vector<16x32xf32>,
    %c0_i32_8 = arith.constant 0 : i32
    %10 = arith.cmpi eq, %arg2, %c0_i32_8 : i32
    %11 = arith.extui %10 : i1 to i32
    %c0_i32_9 = arith.constant 0 : i32
    %12 = arith.cmpi ne, %11, %c0_i32_9 : i32
    scf.if %12 {
      %c0_10 = arith.constant 0 : index
      %c0_11 = arith.constant 0 : index
      %13 = vector.load %arg7[%c0_10, %c0_11] : memref<16x32xf32, #tpu.memory_space<vmem>>, vector<16x32xf32>
      %c0_12 = arith.constant 0 : index
      %c0_13 = arith.constant 0 : index
      %14 = vector.load %arg5[%c0_12, %c0_13] : memref<1x32xf32, #tpu.memory_space<vmem>>, vector<1x32xf32>
      %15 = vector.broadcast %14 : vector<1x32xf32> to vector<16x32xf32>
      %16 = arith.addf %13, %15 : vector<16x32xf32>
      %c0_14 = arith.constant 0 : index
      %c0_15 = arith.constant 0 : index
      %17 = vector.load %arg6[%c0_14, %c0_15] : memref<16x32xf32, #tpu.memory_space<vmem>>, vector<16x32xf32>
      tpu.vector_store %arg6[%c0_14, %c0_15], %16 {strides = array<i32>} : memref<16x32xf32, #tpu.memory_space<vmem>>, vector<16x32xf32>,
    } else {
    }
    return
  }
  func.func @transform_0(%arg0: i32, %arg1: i32, %arg2: i32) -> (i32, i32) {
    %c0_i32 = arith.constant 0 : i32
    return %arg0, %arg2 : i32, i32
  }
  func.func @transform_1(%arg0: i32, %arg1: i32, %arg2: i32) -> (i32, i32) {
    %c0_i32 = arith.constant 0 : i32
    return %arg2, %arg1 : i32, i32
  }
  func.func @transform_2(%arg0: i32, %arg1: i32, %arg2: i32) -> (i32, i32) {
    %c0_i32 = arith.constant 0 : i32
    %c0_i32_0 = arith.constant 0 : i32
    return %c0_i32, %arg1 : i32, i32
  }
  func.func @transform_3(%arg0: i32, %arg1: i32, %arg2: i32) -> (i32, i32) {
    %c0_i32 = arith.constant 0 : i32
    return %arg0, %arg1 : i32, i32
  }
}

module attributes {stable_mosaic.version = 11 : i64} {
  func.func @_linear_kernel(%arg0: i32, %arg1: i32, %arg2: i32, %arg3: memref<16x32xf32, #tpu.memory_space<vmem>>, %arg4: memref<32x64xbf16, #tpu.memory_space<vmem>>, %arg5: memref<1x64xf32, #tpu.memory_space<vmem>>, %arg6: memref<16x64xf32, #tpu.memory_space<vmem>>, %arg7: memref<16x64xf32, #tpu.memory_space<vmem>>) attributes {dimension_semantics = [#tpu.dimension_semantics<parallel>, #tpu.dimension_semantics<parallel>, #tpu.dimension_semantics<arbitrary>], iteration_bounds = array<i64: 1, 1, 1>, scalar_prefetch = 0 : i64, scratch_operands = 1 : i64, tpu.core_type = #tpu.core_type<tc>, window_params = [{transform_indices = @transform_0, window_bounds = array<i64: 16, 32>}, {transform_indices = @transform_1, window_bounds = array<i64: 32, 64>}, {transform_indices = @transform_2, window_bounds = array<i64: 1, 64>}, {transform_indices = @transform_3, window_bounds = array<i64: 16, 64>}]} {
    %c0_i32 = arith.constant 0 : i32
    %0 = arith.cmpi eq, %arg2, %c0_i32 : i32
    %1 = arith.extui %0 : i1 to i32
    %c0_i32_0 = arith.constant 0 : i32
    %2 = arith.cmpi ne, %1, %c0_i32_0 : i32
    scf.if %2 {
      %cst_10 = arith.constant 0.000000e+00 : f32
      %13 = vector.broadcast %cst_10 : f32 to vector<16x64xf32>
      %c0_11 = arith.constant 0 : index
      %c0_12 = arith.constant 0 : index
      %14 = vector.load %arg7[%c0_11, %c0_12] : memref<16x64xf32, #tpu.memory_space<vmem>>, vector<16x64xf32>
      tpu.vector_store %arg7[%c0_11, %c0_12], %13 {strides = array<i32>} : memref<16x64xf32, #tpu.memory_space<vmem>>, vector<16x64xf32>,
    } else {
    }
    %c0 = arith.constant 0 : index
    %c0_1 = arith.constant 0 : index
    %3 = vector.load %arg7[%c0, %c0_1] : memref<16x64xf32, #tpu.memory_space<vmem>>, vector<16x64xf32>
    %c0_2 = arith.constant 0 : index
    %c0_3 = arith.constant 0 : index
    %4 = vector.load %arg3[%c0_2, %c0_3] : memref<16x32xf32, #tpu.memory_space<vmem>>, vector<16x32xf32>
    %5 = arith.truncf %4 : vector<16x32xf32> to vector<16x32xbf16>
    %c0_4 = arith.constant 0 : index
    %c0_5 = arith.constant 0 : index
    %6 = vector.load %arg4[%c0_4, %c0_5] : memref<32x64xbf16, #tpu.memory_space<vmem>>, vector<32x64xbf16>
    %cst = arith.constant dense<0.000000e+00> : vector<16x64xf32>
    %7 = tpu.matmul %5, %6, %cst {dimension_numbers = #tpu.dot_dimension_numbers<[1], [0], [0], [1], [0, 0, 1, 1], [], []>} : vector<16x32xbf16>, vector<32x64xbf16>, vector<16x64xf32> -> vector<16x64xf32>
    %8 = arith.addf %3, %7 : vector<16x64xf32>
    %c0_6 = arith.constant 0 : index
    %c0_7 = arith.constant 0 : index
    %9 = vector.load %arg7[%c0_6, %c0_7] : memref<16x64xf32, #tpu.memory_space<vmem>>, vector<16x64xf32>
    tpu.vector_store %arg7[%c0_6, %c0_7], %8 {strides = array<i32>} : memref<16x64xf32, #tpu.memory_space<vmem>>, vector<16x64xf32>,
    %c0_i32_8 = arith.constant 0 : i32
    %10 = arith.cmpi eq, %arg2, %c0_i32_8 : i32
    %11 = arith.extui %10 : i1 to i32
    %c0_i32_9 = arith.constant 0 : i32
    %12 = arith.cmpi ne, %11, %c0_i32_9 : i32
    scf.if %12 {
      %c0_10 = arith.constant 0 : index
      %c0_11 = arith.constant 0 : index
      %13 = vector.load %arg7[%c0_10, %c0_11] : memref<16x64xf32, #tpu.memory_space<vmem>>, vector<16x64xf32>
      %c0_12 = arith.constant 0 : index
      %c0_13 = arith.constant 0 : index
      %14 = vector.load %arg5[%c0_12, %c0_13] : memref<1x64xf32, #tpu.memory_space<vmem>>, vector<1x64xf32>
      %15 = vector.broadcast %14 : vector<1x64xf32> to vector<16x64xf32>
      %16 = arith.addf %13, %15 : vector<16x64xf32>
      %c0_14 = arith.constant 0 : index
      %c0_15 = arith.constant 0 : index
      %17 = vector.load %arg6[%c0_14, %c0_15] : memref<16x64xf32, #tpu.memory_space<vmem>>, vector<16x64xf32>
      tpu.vector_store %arg6[%c0_14, %c0_15], %16 {strides = array<i32>} : memref<16x64xf32, #tpu.memory_space<vmem>>, vector<16x64xf32>,
    } else {
    }
    return
  }
  func.func @transform_0(%arg0: i32, %arg1: i32, %arg2: i32) -> (i32, i32) {
    %c0_i32 = arith.constant 0 : i32
    return %arg0, %arg2 : i32, i32
  }
  func.func @transform_1(%arg0: i32, %arg1: i32, %arg2: i32) -> (i32, i32) {
    %c0_i32 = arith.constant 0 : i32
    return %arg2, %arg1 : i32, i32
  }
  func.func @transform_2(%arg0: i32, %arg1: i32, %arg2: i32) -> (i32, i32) {
    %c0_i32 = arith.constant 0 : i32
    %c0_i32_0 = arith.constant 0 : i32
    return %c0_i32, %arg1 : i32, i32
  }
  func.func @transform_3(%arg0: i32, %arg1: i32, %arg2: i32) -> (i32, i32) {
    %c0_i32 = arith.constant 0 : i32
    return %arg0, %arg1 : i32, i32
  }
}

module attributes {stable_mosaic.version = 11 : i64} {
  func.func @_generator_kernel(%arg0: i32, %arg1: i32, %arg2: memref<16x32xf32, #tpu.memory_space<vmem>>, %arg3: memref<32x16xbf16, #tpu.memory_space<vmem>>, %arg4: memref<1x16xf32, #tpu.memory_space<vmem>>, %arg5: memref<16x16xf32, #tpu.memory_space<vmem>>, %arg6: memref<16x16xf32, #tpu.memory_space<vmem>>) attributes {dimension_semantics = [#tpu.dimension_semantics<parallel>, #tpu.dimension_semantics<arbitrary>], iteration_bounds = array<i64: 1, 1>, scalar_prefetch = 0 : i64, scratch_operands = 1 : i64, tpu.core_type = #tpu.core_type<tc>, window_params = [{transform_indices = @transform_0, window_bounds = array<i64: 16, 32>}, {transform_indices = @transform_1, window_bounds = array<i64: 32, 16>}, {transform_indices = @transform_2, window_bounds = array<i64: 1, 16>}, {transform_indices = @transform_3, window_bounds = array<i64: 16, 16>}]} {
    %c0 = arith.constant 0 : index
    %c0_0 = arith.constant 0 : index
    %0 = vector.load %arg2[%c0, %c0_0] : memref<16x32xf32, #tpu.memory_space<vmem>>, vector<16x32xf32>
    %1 = arith.truncf %0 : vector<16x32xf32> to vector<16x32xbf16>
    %c0_1 = arith.constant 0 : index
    %c0_2 = arith.constant 0 : index
    %2 = vector.load %arg3[%c0_1, %c0_2] : memref<32x16xbf16, #tpu.memory_space<vmem>>, vector<32x16xbf16>
    %cst = arith.constant dense<0.000000e+00> : vector<16x16xf32>
    %3 = tpu.matmul %1, %2, %cst {dimension_numbers = #tpu.dot_dimension_numbers<[1], [0], [0], [1], [0, 0, 1, 1], [], []>} : vector<16x32xbf16>, vector<32x16xbf16>, vector<16x16xf32> -> vector<16x16xf32>
    %c0_3 = arith.constant 0 : index
    %c0_4 = arith.constant 0 : index
    %4 = vector.load %arg4[%c0_3, %c0_4] : memref<1x16xf32, #tpu.memory_space<vmem>>, vector<1x16xf32>
    %5 = vector.broadcast %4 : vector<1x16xf32> to vector<16x16xf32>
    %6 = arith.addf %3, %5 : vector<16x16xf32>
    %c0_5 = arith.constant 0 : index
    %c0_6 = arith.constant 0 : index
    %7 = vector.load %arg6[%c0_5, %c0_6] : memref<16x16xf32, #tpu.memory_space<vmem>>, vector<16x16xf32>
    tpu.vector_store %arg6[%c0_5, %c0_6], %6 {strides = array<i32>} : memref<16x16xf32, #tpu.memory_space<vmem>>, vector<16x16xf32>,
    %c0_i32 = arith.constant 0 : i32
    %8 = arith.cmpi eq, %arg1, %c0_i32 : i32
    %9 = arith.extui %8 : i1 to i32
    %c0_i32_7 = arith.constant 0 : i32
    %10 = arith.cmpi ne, %9, %c0_i32_7 : i32
    scf.if %10 {
      %c0_8 = arith.constant 0 : index
      %c0_9 = arith.constant 0 : index
      %11 = vector.load %arg6[%c0_8, %c0_9] : memref<16x16xf32, #tpu.memory_space<vmem>>, vector<16x16xf32>
      %cst_10 = arith.constant dense<0xFF800000> : vector<16xf32>
      %12 = vector.multi_reduction <maximumf>, %11, %cst_10 [1] : vector<16x16xf32> to vector<16xf32>
      %13 = vector.shape_cast %12 : vector<16xf32> to vector<16x1xf32>
      %14 = vector.broadcast %13 : vector<16x1xf32> to vector<16x16xf32>
      %15 = arith.subf %11, %14 : vector<16x16xf32>
      %16 = math.exp %15 : vector<16x16xf32>
      %cst_11 = arith.constant dense<0.000000e+00> : vector<16xf32>
      %17 = vector.multi_reduction <add>, %16, %cst_11 [1] : vector<16x16xf32> to vector<16xf32>
      %18 = vector.shape_cast %17 : vector<16xf32> to vector<16x1xf32>
      %19 = math.log %18 : vector<16x1xf32>
      %20 = vector.broadcast %19 : vector<16x1xf32> to vector<16x16xf32>
      %21 = arith.subf %15, %20 : vector<16x16xf32>
      %c0_12 = arith.constant 0 : index
      %c0_13 = arith.constant 0 : index
      %22 = vector.load %arg5[%c0_12, %c0_13] : memref<16x16xf32, #tpu.memory_space<vmem>>, vector<16x16xf32>
      tpu.vector_store %arg5[%c0_12, %c0_13], %21 {strides = array<i32>} : memref<16x16xf32, #tpu.memory_space<vmem>>, vector<16x16xf32>,
    } else {
    }
    return
  }
  func.func @transform_0(%arg0: i32, %arg1: i32) -> (i32, i32) {
    %c0_i32 = arith.constant 0 : i32
    %c0_i32_0 = arith.constant 0 : i32
    return %arg0, %c0_i32 : i32, i32
  }
  func.func @transform_1(%arg0: i32, %arg1: i32) -> (i32, i32) {
    %c0_i32 = arith.constant 0 : i32
    %c0_i32_0 = arith.constant 0 : i32
    return %c0_i32, %arg1 : i32, i32
  }
  func.func @transform_2(%arg0: i32, %arg1: i32) -> (i32, i32) {
    %c0_i32 = arith.constant 0 : i32
    %c0_i32_0 = arith.constant 0 : i32
    return %c0_i32, %arg1 : i32, i32
  }
  func.func @transform_3(%arg0: i32, %arg1: i32) -> (i32, i32) {
    %c0_i32 = arith.constant 0 : i32
    %c0_i32_0 = arith.constant 0 : i32
    return %arg0, %c0_i32 : i32, i32
  }
}

</mosaic_0001>

<llo_original>
// kernel: _lambda_.56
$region0: #{_lambda_.56}
  #allocation0 [shape = 'u32[]', space=smem, size = 0x4, offset = 0x4, fixed_abs, tag = 'smem constant byte address 0x4 - core index']
  #allocation1 [shape = 'u32[144,128]{1,0:T(1,128)}', space=vmem, size = 0x12000, scoped, tag = 'internal scratch']
  %s0 = inlined_call_operand.vmem [shape: f32[16,32], index: 0, kind: input, shape index: {}]
  %s1 = inlined_call_operand.vmem [shape: f32[1,32], index: 1, kind: input, shape index: {}]
  %s2 = inlined_call_operand.vmem [shape: f32[1,32], index: 2, kind: input, shape index: {}]
  %s3 = inlined_call_operand.vmem [shape: f32[16,32], index: 3, kind: output, shape index: {}]
  %s4 = sld [smem:[#allocation0]]
  $region22: #{_lambda_.56} parent=0
    _
  %s6 = ssub.s32 1, %s4
  %s7 = scalar_select 0, %s6, %s4
  // Predicated region
  $region2: #{_lambda_.56} parent=0 // pred_check
    _
  $region3: #{_lambda_.56} parent=0 // pred_check_branch
    %9 = sbr.rel (0) target = $region5
  $region4: #{_lambda_.56} parent=0 // pred_region
    _
  $region5: #{_lambda_.56} parent=0 // pred_fallthru
    _
  // Predicated region
  $region6: #{_lambda_.56} parent=0 // pred_check
    _
  $region7: #{_lambda_.56} parent=0 // pred_check_branch
    %11 = sbr.rel (0) target = $region9
  $region8: #{_lambda_.56} parent=0 // pred_region
    _
  $region9: #{_lambda_.56} parent=0 // pred_fallthru
    _
  // Predicated region
  $region10: #{_lambda_.56} parent=0 // pred_check
    _
  $region11: #{_lambda_.56} parent=0 // pred_check_branch
    %13 = sbr.rel (0) target = $region13
  $region12: #{_lambda_.56} parent=0 // pred_region
    _
  $region13: #{_lambda_.56} parent=0 // pred_fallthru
    _
  %v14 = vld [vmem:[%s0] sm:$0xff]
  %v15 = vld [vmem:[%s0 + $0x8] sm:$0xff]
  %vm16 = vcmask 261120
  %v17 = vsel %vm16, %v14, 0.0
  %18 = vadd.xlane.f32.xlu0 %v17
  %v19 = vpop.xlane.xlu0 %18
  %v20 = vsel %vm16, %v15, 0.0
  %21 = vadd.xlane.f32.xlu0 %v20
  %v22 = vpop.xlane.xlu0 %21
  %v23 = vrcp.pop 32.0
  %v24 = vmul.f32 %v19, %v23
  %v25 = vmul.f32 %v22, %v23
  %v26 = vsub.f32 %v14, %v24
  %v27 = vsub.f32 %v15, %v25
  %v28 = vmul.f32 %v26, %v26
  %v29 = vmul.f32 %v27, %v27
  %v30 = vsel %vm16, %v28, 0.0
  %31 = vadd.xlane.f32.xlu0 %v30
  %v32 = vpop.xlane.xlu0 %31
  %v33 = vsel %vm16, %v29, 0.0
  %34 = vadd.xlane.f32.xlu0 %v33
  %v35 = vpop.xlane.xlu0 %34
  %v36 = vmul.f32 %v32, 0.032258064
  %v37 = vmul.f32 %v35, 0.032258064
  %v38 = vrsqrt.pop %v36
  %v39 = vmul.f32 %v36, %v38
  %vm40 = vcmp.eq.f32.partialorder %v36, inf
  %v41 = vsel %vm40, %v36, %v39
  %vm42 = vcmp.eq.f32.partialorder %v36, 0.0
  %v43 = vand.u32 %v36, 2147483648
  %v44 = vsel %vm42, %v43, %v41
  %v45 = vrsqrt.pop %v37
  %v46 = vmul.f32 %v37, %v45
  %vm47 = vcmp.eq.f32.partialorder %v37, inf
  %v48 = vsel %vm47, %v37, %v46
  %vm49 = vcmp.eq.f32.partialorder %v37, 0.0
  %v50 = vand.u32 %v37, 2147483648
  %v51 = vsel %vm49, %v50, %v48
  %v52 = vld [vmem:[%s1] sm:$0x1]
  %v54 = vlaneseq
  %v55 = vshrl.u32 %v54, 7
  %v56 = vsub.s32 0, %v55
  %v57 = vrot.slane %v52, %v56
  %v59 = vmul.f32 %v57, %v26
  %v60 = vmul.f32 %v57, %v27
  %v61 = vadd.f32 %v44, 1e-06
  %v62 = vadd.f32 %v51, 1e-06
  %v63 = vrcp.pop %v61
  %v64 = vmul.f32 %v59, %v63
  %v65 = vrcp.pop %v62
  %v66 = vmul.f32 %v60, %v65
  %v67 = vld [vmem:[%s2] sm:$0x1]
  %v69 = vlaneseq
  %v70 = vshrl.u32 %v69, 7
  %v71 = vsub.s32 0, %v70
  %v72 = vrot.slane %v67, %v71
  %v74 = vadd.f32 %v64, %v72
  %v75 = vadd.f32 %v66, %v72
  %76 = vst.msk [vmem:[%s3] sm:$0xff] %vm16, %v74
  %77 = vst.msk [vmem:[%s3 + $0x8] sm:$0xff] %vm16, %v75
  // Predicated region
  $region14: #{_lambda_.56} parent=0 // pred_check
    _
  $region15: #{_lambda_.56} parent=0 // pred_check_branch
    %79 = sbr.rel (0) target = $region17
  $region16: #{_lambda_.56} parent=0 // pred_region
    _
  $region17: #{_lambda_.56} parent=0 // pred_fallthru
    _
  // Predicated region
  $region18: #{_lambda_.56} parent=0 // pred_check
    _
  $region19: #{_lambda_.56} parent=0 // pred_check_branch
    %81 = sbr.rel (0) target = $region21
  $region20: #{_lambda_.56} parent=0 // pred_region
    _
  $region21: #{_lambda_.56} parent=0 // pred_fallthru
    _

// kernel: _lambda_.57
$region0: #{_lambda_.57}
  #allocation0 [shape = 'u32[]', space=smem, size = 0x4, offset = 0x4, fixed_abs, tag = 'smem constant byte address 0x4 - core index']
  #allocation1 [shape = 'u32[144,128]{1,0:T(1,128)}', space=vmem, size = 0x12000, scoped, tag = 'internal scratch']
  #allocation2 [shape = 'f32[16,96]{1,0:T(8,128)}', space=vmem, size = 0x2000, scoped, tag = 'scratch operand']
  %s0 = inlined_call_operand.vmem [shape: f32[16,32], index: 0, kind: input, shape index: {}]
  %s1 = inlined_call_operand.vmem [shape: bf16[32,96], index: 1, kind: input, shape index: {}]
  %s2 = inlined_call_operand.vmem [shape: f32[1,96], index: 2, kind: input, shape index: {}]
  %s3 = inlined_call_operand.vmem [shape: f32[16,96], index: 3, kind: output, shape index: {}]
  %s4 = sld [smem:[#allocation0]]
  $region30: #{_lambda_.57} parent=0
    _
  %s6 = ssub.s32 1, %s4
  %s7 = scalar_select 0, %s6, %s4
  // Predicated region
  $region2: #{_lambda_.57} parent=0 // pred_check
    _
  $region3: #{_lambda_.57} parent=0 // pred_check_branch
    %9 = sbr.rel (0) target = $region5
  $region4: #{_lambda_.57} parent=0 // pred_region
    _
  $region5: #{_lambda_.57} parent=0 // pred_fallthru
    _
  // Predicated region
  $region6: #{_lambda_.57} parent=0 // pred_check
    _
  $region7: #{_lambda_.57} parent=0 // pred_check_branch
    %11 = sbr.rel (0) target = $region9
  $region8: #{_lambda_.57} parent=0 // pred_region
    _
  $region9: #{_lambda_.57} parent=0 // pred_fallthru
    _
  // Predicated region
  $region10: #{_lambda_.57} parent=0 // pred_check
    _
  $region11: #{_lambda_.57} parent=0 // pred_check_branch
    %13 = sbr.rel (0) target = $region13
  $region12: #{_lambda_.57} parent=0 // pred_region
    _
  $region13: #{_lambda_.57} parent=0 // pred_fallthru
    _
  %p15 = scmp.eq.s32.totalorder 0, 0
  // Predicated region
  $region14: #{_lambda_.57} parent=0 // pred_check
    %p16 = pneg %p15
  $region15: #{_lambda_.57} parent=0 // pred_check_branch
    %18 = sbr.rel (%p16) target = $region17
  $region16: #{_lambda_.57} parent=0 // pred_region
    %vm19 = vcmask 785408
    %20 = vst.msk [vmem:[#allocation2] sm:$0xff] %vm19, 0.0
    %21 = vst.msk [vmem:[#allocation2 + $0x8] sm:$0xff] %vm19, 0.0
  $region17: #{_lambda_.57} parent=0 // pred_fallthru
    _
  %v22 = vld [vmem:[#allocation2] sm:$0xff]
  %v23 = vld [vmem:[#allocation2 + $0x8] sm:$0xff]
  %v24 = vld [vmem:[%s0] sm:$0xff]
  %v25 = vld [vmem:[%s0 + $0x8] sm:$0xff]
  %v26 = vpack.c.bf16 %v25, %v24
  %v27 = vld [vmem:[%s1] sm:$0xf]
  %v28 = vld [vmem:[%s1 + $0x4] sm:$0xf]
  %v29 = vld [vmem:[%s1 + $0x8] sm:$0xf]
  %v30 = vld [vmem:[%s1 + $0xc] sm:$0xf]
  %v35 = vunpack.c.l.b16 %v27
  %v36 = vunpack.c.l.b16 %v28
  %v37 = vunpack.c.l.b16 %v29
  %v38 = vunpack.c.l.b16 %v30
  %v39 = vpack.c.b16 %v36, %v35
  %v40 = vpack.c.b16 %v38, %v37
  %vm43 = vcmask 261120
  %v45 = vsel %vm43, %v26, 0
  %47 = vmatprep.subr.bf16.mxu0 0
  %48 = vmatpush1.bf16.msra.mxu0 0
  %49 = vmatprep.subr.bf16.mxu0 0
  %50 = vmatpush1.bf16.msra.mxu0 0
  %51 = vmatprep.subr.bf16.mxu0 0
  %52 = vmatpush1.bf16.msra.mxu0 0
  %53 = vmatprep.subr.bf16.mxu0 0
  %54 = vmatpush1.bf16.msra.mxu0 0
  %55 = vmatprep.subr.bf16.mxu0 0
  %56 = vmatpush1.bf16.msra.mxu0 0
  %57 = vmatprep.subr.bf16.mxu0 0
  %58 = vmatpush1.bf16.msra.mxu0 0
  %59 = vmatprep.subr.bf16.mxu0 0
  %60 = vmatpush1.bf16.msra.mxu0 %v40
  %61 = vmatprep.subr.bf16.mxu0 0
  %62 = vmatpush1.bf16.msra.mxu0 %v39
  %63 = vmatprep.subr.bf16.mxu0 0
  %64 = vmatpush2.bf16.msra.mxu0 0
  %65 = vmatprep.subr.bf16.mxu0 0
  %66 = vmatpush2.bf16.msra.mxu0 0
  %67 = vmatprep.subr.bf16.mxu0 0
  %68 = vmatpush2.bf16.msra.mxu0 0
  %69 = vmatprep.subr.bf16.mxu0 0
  %70 = vmatpush2.bf16.msra.mxu0 0
  %71 = vmatprep.subr.bf16.mxu0 0
  %72 = vmatpush2.bf16.msra.mxu0 0
  %73 = vmatprep.subr.bf16.mxu0 0
  %74 = vmatpush2.bf16.msra.mxu0 0
  %75 = vmatprep.subr.bf16.mxu0 0
  %76 = vmatpush2.bf16.msra.mxu0 0
  %77 = vmatprep.subr.bf16.mxu0 0
  %78 = vmatpush2.bf16.msra.mxu0 0
  %79 = vmatprep.mubr.bf16.mxu0 0
  %80 = vmatmul.mubr.bf16.gmra.mxu0 %v45
  %v81 = vpop.f32.mrf.mxu0
  %v82 = vadd.f32 0.0, %v81
  %v83 = vpop.f32.mrf.mxu0
  %v84 = vpop.f32.mrf.mxu0
  %v85 = vadd.f32 0.0, %v84
  %v86 = vpop.f32.mrf.mxu0
  %87 = vdwg.mxu0
  %v88 = vadd.f32 %v22, %v82
  %v89 = vadd.f32 %v23, %v85
  %vm90 = vcmask 785408
  %91 = vst.msk [vmem:[#allocation2] sm:$0xff] %vm90, %v88
  %92 = vst.msk [vmem:[#allocation2 + $0x8] sm:$0xff] %vm90, %v89
  // Predicated region
  $region18: #{_lambda_.57} parent=0 // pred_check
    %p93 = pneg %p15
  $region19: #{_lambda_.57} parent=0 // pred_check_branch
    %95 = sbr.rel (%p93) target = $region21
  $region20: #{_lambda_.57} parent=0 // pred_region
    %v96 = vld [vmem:[#allocation2] sm:$0xff]
    %v97 = vld [vmem:[#allocation2 + $0x8] sm:$0xff]
    %v98 = vld [vmem:[%s2] sm:$0x1]
    %v100 = vlaneseq
    %v101 = vshrl.u32 %v100, 7
    %v102 = vsub.s32 0, %v101
    %v103 = vrot.slane %v98, %v102
    %v105 = vadd.f32 %v96, %v103
    %v106 = vadd.f32 %v97, %v103
    %107 = vst.msk [vmem:[%s3] sm:$0xff] %vm90, %v105
    %108 = vst.msk [vmem:[%s3 + $0x8] sm:$0xff] %vm90, %v106
  $region21: #{_lambda_.57} parent=0 // pred_fallthru
    _
  // Predicated region
  $region22: #{_lambda_.57} parent=0 // pred_check
    _
  $region23: #{_lambda_.57} parent=0 // pred_check_branch
    %110 = sbr.rel (0) target = $region25
  $region24: #{_lambda_.57} parent=0 // pred_region
    _
  $region25: #{_lambda_.57} parent=0 // pred_fallthru
    _
  // Predicated region
  $region26: #{_lambda_.57} parent=0 // pred_check
    _
  $region27: #{_lambda_.57} parent=0 // pred_check_branch
    %112 = sbr.rel (0) target = $region29
  $region28: #{_lambda_.57} parent=0 // pred_region
    _
  $region29: #{_lambda_.57} parent=0 // pred_fallthru
    _

// kernel: _lambda_.59
$region0: #{_lambda_.59}
  #allocation0 [shape = 'u32[]', space=smem, size = 0x4, offset = 0x4, fixed_abs, tag = 'smem constant byte address 0x4 - core index']
  #allocation1 [shape = 'u32[144,128]{1,0:T(1,128)}', space=vmem, size = 0x12000, scoped, tag = 'internal scratch']
  #allocation2 [shape = 'f32[16,32]{1,0:T(8,128)}', space=vmem, size = 0x2000, scoped, tag = 'scratch operand']
  %s0 = inlined_call_operand.vmem [shape: f32[16,32], index: 0, kind: input, shape index: {}]
  %s1 = inlined_call_operand.vmem [shape: bf16[32,32], index: 1, kind: input, shape index: {}]
  %s2 = inlined_call_operand.vmem [shape: f32[1,32], index: 2, kind: input, shape index: {}]
  %s3 = inlined_call_operand.vmem [shape: f32[16,32], index: 3, kind: output, shape index: {}]
  %s4 = sld [smem:[#allocation0]]
  $region30: #{_lambda_.59} parent=0
    _
  %s6 = ssub.s32 1, %s4
  %s7 = scalar_select 0, %s6, %s4
  // Predicated region
  $region2: #{_lambda_.59} parent=0 // pred_check
    _
  $region3: #{_lambda_.59} parent=0 // pred_check_branch
    %9 = sbr.rel (0) target = $region5
  $region4: #{_lambda_.59} parent=0 // pred_region
    _
  $region5: #{_lambda_.59} parent=0 // pred_fallthru
    _
  // Predicated region
  $region6: #{_lambda_.59} parent=0 // pred_check
    _
  $region7: #{_lambda_.59} parent=0 // pred_check_branch
    %11 = sbr.rel (0) target = $region9
  $region8: #{_lambda_.59} parent=0 // pred_region
    _
  $region9: #{_lambda_.59} parent=0 // pred_fallthru
    _
  // Predicated region
  $region10: #{_lambda_.59} parent=0 // pred_check
    _
  $region11: #{_lambda_.59} parent=0 // pred_check_branch
    %13 = sbr.rel (0) target = $region13
  $region12: #{_lambda_.59} parent=0 // pred_region
    _
  $region13: #{_lambda_.59} parent=0 // pred_fallthru
    _
  %p15 = scmp.eq.s32.totalorder 0, 0
  // Predicated region
  $region14: #{_lambda_.59} parent=0 // pred_check
    %p16 = pneg %p15
  $region15: #{_lambda_.59} parent=0 // pred_check_branch
    %18 = sbr.rel (%p16) target = $region17
  $region16: #{_lambda_.59} parent=0 // pred_region
    %vm19 = vcmask 261120
    %20 = vst.msk [vmem:[#allocation2] sm:$0xff] %vm19, 0.0
    %21 = vst.msk [vmem:[#allocation2 + $0x8] sm:$0xff] %vm19, 0.0
  $region17: #{_lambda_.59} parent=0 // pred_fallthru
    _
  %v22 = vld [vmem:[#allocation2] sm:$0xff]
  %v23 = vld [vmem:[#allocation2 + $0x8] sm:$0xff]
  %v24 = vld [vmem:[%s0] sm:$0xff]
  %v25 = vld [vmem:[%s0 + $0x8] sm:$0xff]
  %v26 = vpack.c.bf16 %v25, %v24
  %v27 = vld [vmem:[%s1] sm:$0xf]
  %v28 = vld [vmem:[%s1 + $0x4] sm:$0xf]
  %v29 = vld [vmem:[%s1 + $0x8] sm:$0xf]
  %v30 = vld [vmem:[%s1 + $0xc] sm:$0xf]
  %v35 = vunpack.c.l.b16 %v27
  %v36 = vunpack.c.l.b16 %v28
  %v37 = vunpack.c.l.b16 %v29
  %v38 = vunpack.c.l.b16 %v30
  %v39 = vpack.c.b16 %v36, %v35
  %v40 = vpack.c.b16 %v38, %v37
  %vm43 = vcmask 261120
  %v45 = vsel %vm43, %v26, 0
  %47 = vmatprep.subr.bf16.mxu0 0
  %48 = vmatpush1.bf16.msra.mxu0 0
  %49 = vmatprep.subr.bf16.mxu0 0
  %50 = vmatpush1.bf16.msra.mxu0 0
  %51 = vmatprep.subr.bf16.mxu0 0
  %52 = vmatpush1.bf16.msra.mxu0 0
  %53 = vmatprep.subr.bf16.mxu0 0
  %54 = vmatpush1.bf16.msra.mxu0 0
  %55 = vmatprep.subr.bf16.mxu0 0
  %56 = vmatpush1.bf16.msra.mxu0 0
  %57 = vmatprep.subr.bf16.mxu0 0
  %58 = vmatpush1.bf16.msra.mxu0 0
  %59 = vmatprep.subr.bf16.mxu0 0
  %60 = vmatpush1.bf16.msra.mxu0 %v40
  %61 = vmatprep.subr.bf16.mxu0 0
  %62 = vmatpush1.bf16.msra.mxu0 %v39
  %63 = vmatprep.subr.bf16.mxu0 0
  %64 = vmatpush2.bf16.msra.mxu0 0
  %65 = vmatprep.subr.bf16.mxu0 0
  %66 = vmatpush2.bf16.msra.mxu0 0
  %67 = vmatprep.subr.bf16.mxu0 0
  %68 = vmatpush2.bf16.msra.mxu0 0
  %69 = vmatprep.subr.bf16.mxu0 0
  %70 = vmatpush2.bf16.msra.mxu0 0
  %71 = vmatprep.subr.bf16.mxu0 0
  %72 = vmatpush2.bf16.msra.mxu0 0
  %73 = vmatprep.subr.bf16.mxu0 0
  %74 = vmatpush2.bf16.msra.mxu0 0
  %75 = vmatprep.subr.bf16.mxu0 0
  %76 = vmatpush2.bf16.msra.mxu0 0
  %77 = vmatprep.subr.bf16.mxu0 0
  %78 = vmatpush2.bf16.msra.mxu0 0
  %79 = vmatprep.mubr.bf16.mxu0 0
  %80 = vmatmul.mubr.bf16.gmra.mxu0 %v45
  %v81 = vpop.f32.mrf.mxu0
  %v82 = vadd.f32 0.0, %v81
  %v83 = vpop.f32.mrf.mxu0
  %v84 = vpop.f32.mrf.mxu0
  %v85 = vadd.f32 0.0, %v84
  %v86 = vpop.f32.mrf.mxu0
  %87 = vdwg.mxu0
  %v88 = vadd.f32 %v22, %v82
  %v89 = vadd.f32 %v23, %v85
  %90 = vst.msk [vmem:[#allocation2] sm:$0xff] %vm43, %v88
  %91 = vst.msk [vmem:[#allocation2 + $0x8] sm:$0xff] %vm43, %v89
  // Predicated region
  $region18: #{_lambda_.59} parent=0 // pred_check
    %p92 = pneg %p15
  $region19: #{_lambda_.59} parent=0 // pred_check_branch
    %94 = sbr.rel (%p92) target = $region21
  $region20: #{_lambda_.59} parent=0 // pred_region
    %v95 = vld [vmem:[#allocation2] sm:$0xff]
    %v96 = vld [vmem:[#allocation2 + $0x8] sm:$0xff]
    %v97 = vld [vmem:[%s2] sm:$0x1]
    %v99 = vlaneseq
    %v100 = vshrl.u32 %v99, 7
    %v101 = vsub.s32 0, %v100
    %v102 = vrot.slane %v97, %v101
    %v104 = vadd.f32 %v95, %v102
    %v105 = vadd.f32 %v96, %v102
    %106 = vst.msk [vmem:[%s3] sm:$0xff] %vm43, %v104
    %107 = vst.msk [vmem:[%s3 + $0x8] sm:$0xff] %vm43, %v105
  $region21: #{_lambda_.59} parent=0 // pred_fallthru
    _
  // Predicated region
  $region22: #{_lambda_.59} parent=0 // pred_check
    _
  $region23: #{_lambda_.59} parent=0 // pred_check_branch
    %109 = sbr.rel (0) target = $region25
  $region24: #{_lambda_.59} parent=0 // pred_region
    _
  $region25: #{_lambda_.59} parent=0 // pred_fallthru
    _
  // Predicated region
  $region26: #{_lambda_.59} parent=0 // pred_check
    _
  $region27: #{_lambda_.59} parent=0 // pred_check_branch
    %111 = sbr.rel (0) target = $region29
  $region28: #{_lambda_.59} parent=0 // pred_region
    _
  $region29: #{_lambda_.59} parent=0 // pred_fallthru
    _

// kernel: _lambda_.58
$region0: #{_lambda_.58}
  #allocation0 [shape = 'u32[]', space=smem, size = 0x4, offset = 0x4, fixed_abs, tag = 'smem constant byte address 0x4 - core index']
  #allocation1 [shape = 'u32[144,128]{1,0:T(1,128)}', space=vmem, size = 0x12000, scoped, tag = 'internal scratch']
  %s0 = inlined_call_operand.vmem [shape: f32[2,8,32], index: 0, kind: input, shape index: {}]
  %s1 = inlined_call_operand.vmem [shape: f32[2,8,32], index: 1, kind: input, shape index: {}]
  %s2 = inlined_call_operand.vmem [shape: f32[2,8,32], index: 2, kind: input, shape index: {}]
  %s3 = inlined_call_operand.vmem [shape: s8[2,8,8], index: 3, kind: input, shape index: {}]
  %s4 = inlined_call_operand.vmem [shape: f32[2,8,32], index: 4, kind: output, shape index: {}]
  %s5 = sld [smem:[#allocation0]]
  $region49: #{_lambda_.58} parent=0
    _
  %s7 = ssub.s32 1, %s5
  %s8 = scalar_select 0, %s7, %s5
  loop: start=0, step=1, limit=4
  $region2: #{_lambda_.58} parent=0 // loop_pre_header
    _
  $region3: #{_lambda_.58} parent=0 // loop_header
    %s10 = sphi 0, %s14
    %p11 = scmp.ge.s32.totalorder %s10, 4
    %s20 = sphi 0, %s22
    %s23 = sphi 0, %s20
    %s24 = sphi 0, %s23
    %s40 = sphi 0, %s24
    %s46 = sphi 0, %s48
    %s49 = sphi 0, %s46
    %s50 = sphi 0, %s49
    %s66 = sphi 0, %s50
    %s72 = sphi 0, %s74
    %s75 = sphi 0, %s72
    %s76 = sphi 0, %s75
    %s92 = sphi 0, %s76
    %s98 = sphi 0, %s100
    %s101 = sphi 0, %s98
    %s102 = sphi 0, %s101
    %s118 = sphi 0, %s102
    %s124 = sphi 0, %s126
    %s127 = sphi 0, %s124
    %s128 = sphi 0, %s127
    %s144 = sphi 0, %s128
  $region4: #{_lambda_.58} parent=0 // loop_header_branch
    %13 = sbr.rel (%p11) target = $region8
  $region5: #{_lambda_.58} parent=0 // loop_body
    %s15 = ssub.s32 %s10, 1
    %s16 = ssub.s32 %s10, 2
    %s17 = sadd.s32 %s10, 1
    %s18 = ssub.s32 %s10, %s17
    %p19 = scmp.eq.s32.totalorder %s18, 0
    %s21 = sadd.s32 %s20, 1
    %s22 = scalar_select %p19, %s20, %s21
    %p25 = pneg %p19
    %p26 = scmp.eq.s32.totalorder %s10, 1
    %p27 = por %p25, %p26
    %p28 = scmp.ne.s32.totalorder %s20, %s23
    %p29 = scmp.eq.s32.totalorder %s10, 0
    %p30 = por %p28, %p29
    %p31 = scmp.ne.s32.totalorder %s20, %s23
    %p32 = scmp.eq.s32.totalorder %s15, 1
    %p33 = por %p31, %p32
    %p34 = scmp.ne.s32.totalorder %s23, %s24
    %p35 = scmp.eq.s32.totalorder %s15, 0
    %p36 = por %p34, %p35
    %p37 = scmp.ne.s32.totalorder %s23, %s24
    %p38 = scmp.eq.s32.totalorder %s16, 1
    %p39 = por %p37, %p38
    %p41 = scmp.ne.s32.totalorder %s24, %s40
    %p42 = scmp.eq.s32.totalorder %s16, 0
    %p43 = por %p41, %p42
    %s44 = ssub.s32 %s10, %s17
    %p45 = scmp.eq.s32.totalorder %s44, 0
    %s47 = sadd.s32 %s46, 1
    %s48 = scalar_select %p45, %s46, %s47
    %p51 = pneg %p45
    %p52 = scmp.eq.s32.totalorder %s10, 1
    %p53 = por %p51, %p52
    %p54 = scmp.ne.s32.totalorder %s46, %s49
    %p55 = scmp.eq.s32.totalorder %s10, 0
    %p56 = por %p54, %p55
    %p57 = scmp.ne.s32.totalorder %s46, %s49
    %p58 = scmp.eq.s32.totalorder %s15, 1
    %p59 = por %p57, %p58
    %p60 = scmp.ne.s32.totalorder %s49, %s50
    %p61 = scmp.eq.s32.totalorder %s15, 0
    %p62 = por %p60, %p61
    %p63 = scmp.ne.s32.totalorder %s49, %s50
    %p64 = scmp.eq.s32.totalorder %s16, 1
    %p65 = por %p63, %p64
    %p67 = scmp.ne.s32.totalorder %s50, %s66
    %p68 = scmp.eq.s32.totalorder %s16, 0
    %p69 = por %p67, %p68
    %s70 = ssub.s32 %s10, %s17
    %p71 = scmp.eq.s32.totalorder %s70, 0
    %s73 = sadd.s32 %s72, 1
    %s74 = scalar_select %p71, %s72, %s73
    %p77 = pneg %p71
    %p78 = scmp.eq.s32.totalorder %s10, 1
    %p79 = por %p77, %p78
    %p80 = scmp.ne.s32.totalorder %s72, %s75
    %p81 = scmp.eq.s32.totalorder %s10, 0
    %p82 = por %p80, %p81
    %p83 = scmp.ne.s32.totalorder %s72, %s75
    %p84 = scmp.eq.s32.totalorder %s15, 1
    %p85 = por %p83, %p84
    %p86 = scmp.ne.s32.totalorder %s75, %s76
    %p87 = scmp.eq.s32.totalorder %s15, 0
    %p88 = por %p86, %p87
    %p89 = scmp.ne.s32.totalorder %s75, %s76
    %p90 = scmp.eq.s32.totalorder %s16, 1
    %p91 = por %p89, %p90
    %p93 = scmp.ne.s32.totalorder %s76, %s92
    %p94 = scmp.eq.s32.totalorder %s16, 0
    %p95 = por %p93, %p94
    %s96 = ssub.s32 %s10, %s17
    %p97 = scmp.eq.s32.totalorder %s96, 0
    %s99 = sadd.s32 %s98, 1
    %s100 = scalar_select %p97, %s98, %s99
    %p103 = pneg %p97
    %p104 = scmp.eq.s32.totalorder %s10, 1
    %p105 = por %p103, %p104
    %p106 = scmp.ne.s32.totalorder %s98, %s101
    %p107 = scmp.eq.s32.totalorder %s10, 0
    %p108 = por %p106, %p107
    %p109 = scmp.ne.s32.totalorder %s98, %s101
    %p110 = scmp.eq.s32.totalorder %s15, 1
    %p111 = por %p109, %p110
    %p112 = scmp.ne.s32.totalorder %s101, %s102
    %p113 = scmp.eq.s32.totalorder %s15, 0
    %p114 = por %p112, %p113
    %p115 = scmp.ne.s32.totalorder %s101, %s102
    %p116 = scmp.eq.s32.totalorder %s16, 1
    %p117 = por %p115, %p116
    %p119 = scmp.ne.s32.totalorder %s102, %s118
    %p120 = scmp.eq.s32.totalorder %s16, 0
    %p121 = por %p119, %p120
    %s122 = ssub.s32 %s10, %s17
    %p123 = scmp.eq.s32.totalorder %s122, 0
    %s125 = sadd.s32 %s124, 1
    %s126 = scalar_select %p123, %s124, %s125
    %p129 = pneg %p123
    %p130 = scmp.eq.s32.totalorder %s10, 1
    %p131 = por %p129, %p130
    %p132 = scmp.ne.s32.totalorder %s124, %s127
    %p133 = scmp.eq.s32.totalorder %s10, 0
    %p134 = por %p132, %p133
    %p135 = scmp.ne.s32.totalorder %s124, %s127
    %p136 = scmp.eq.s32.totalorder %s15, 1
    %p137 = por %p135, %p136
    %p138 = scmp.ne.s32.totalorder %s127, %s128
    %p139 = scmp.eq.s32.totalorder %s15, 0
    %p140 = por %p138, %p139
    %p141 = scmp.ne.s32.totalorder %s127, %s128
    %p142 = scmp.eq.s32.totalorder %s16, 1
    %p143 = por %p141, %p142
    %p145 = scmp.ne.s32.totalorder %s128, %s144
    %p146 = scmp.eq.s32.totalorder %s16, 0
    %p147 = por %p145, %p146
    %p148 = scmp.le.s32.totalorder 1, %s10
    %p149 = scmp.lt.s32.totalorder %s10, 3
    %p150 = pnand %p148, %p149
    %p151 = pneg %p150
    // Predicated region
    $region9: #{_lambda_.58} parent=5 // pred_check
      _
    $region10: #{_lambda_.58} parent=5 // pred_check_branch
      %153 = sbr.rel (%p150) target = $region12
    $region11: #{_lambda_.58} parent=5 // pred_region
      %s154 = ssub.s32 %s10, 1
    $region12: #{_lambda_.58} parent=5 // pred_fallthru
      _
    %p155 = scmp.lt.s32.totalorder %s10, 2
    // Predicated region
    $region13: #{_lambda_.58} parent=5 // pred_check
      %p156 = pneg %p155
    $region14: #{_lambda_.58} parent=5 // pred_check_branch
      %158 = sbr.rel (%p156) target = $region16
    $region15: #{_lambda_.58} parent=5 // pred_region
      // Predicated region
      $region17: #{_lambda_.58} parent=15 // pred_check
        %p159 = pneg %p30
      $region18: #{_lambda_.58} parent=15 // pred_check_branch
        %161 = sbr.rel (%p159) target = $region20
      $region19: #{_lambda_.58} parent=15 // pred_region
        %p162 = scmp.lt.s32.totalorder %s10, 1
        %s163 = scalar_select %p162, %s10, 1
        %s164 = smul.addr %s163, 8
        %s165 = scalar_lea.vmem %s0, %s164
      $region20: #{_lambda_.58} parent=15 // pred_fallthru
        _
      // Predicated region
      $region21: #{_lambda_.58} parent=15 // pred_check
        %p166 = pneg %p56
      $region22: #{_lambda_.58} parent=15 // pred_check_branch
        %168 = sbr.rel (%p166) target = $region24
      $region23: #{_lambda_.58} parent=15 // pred_region
        %p169 = scmp.lt.s32.totalorder %s10, 1
        %s170 = scalar_select %p169, %s10, 1
        %s171 = smul.addr %s170, 8
        %s172 = scalar_lea.vmem %s1, %s171
      $region24: #{_lambda_.58} parent=15 // pred_fallthru
        _
      // Predicated region
      $region25: #{_lambda_.58} parent=15 // pred_check
        %p173 = pneg %p82
      $region26: #{_lambda_.58} parent=15 // pred_check_branch
        %175 = sbr.rel (%p173) target = $region28
      $region27: #{_lambda_.58} parent=15 // pred_region
        %p176 = scmp.lt.s32.totalorder %s10, 1
        %s177 = scalar_select %p176, %s10, 1
        %s178 = smul.addr %s177, 8
        %s179 = scalar_lea.vmem %s2, %s178
      $region28: #{_lambda_.58} parent=15 // pred_fallthru
        _
      // Predicated region
      $region29: #{_lambda_.58} parent=15 // pred_check
        %p180 = pneg %p108
      $region30: #{_lambda_.58} parent=15 // pred_check_branch
        %182 = sbr.rel (%p180) target = $region32
      $region31: #{_lambda_.58} parent=15 // pred_region
        %p183 = scmp.lt.s32.totalorder %s10, 1
        %s184 = scalar_select %p183, %s10, 1
        %s185 = smul.addr %s184, 2
        %s186 = scalar_lea.vmem %s3, %s185
      $region32: #{_lambda_.58} parent=15 // pred_fallthru
        _
    $region16: #{_lambda_.58} parent=5 // pred_fallthru
      _
    %p187 = scmp.le.s32.totalorder 1, %s10
    %p188 = scmp.lt.s32.totalorder %s10, 3
    %p189 = pnand %p187, %p188
    %p190 = pneg %p189
    // Predicated region
    $region33: #{_lambda_.58} parent=5 // pred_check
      _
    $region34: #{_lambda_.58} parent=5 // pred_check_branch
      %192 = sbr.rel (%p189) target = $region36
    $region35: #{_lambda_.58} parent=5 // pred_region
      %s193 = ssub.s32 %s10, 1
      %p194 = scmp.lt.s32.totalorder %s15, 1
      %s195 = scalar_select %p194, %s15, 1
      %s196 = smul.addr %s195, 8
      %s197 = scalar_lea.vmem %s0, %s196
      %p198 = pneg %p36
      %p199 = pneg %p33
      %p200 = scmp.lt.s32.totalorder %s15, 1
      %s201 = scalar_select %p200, %s15, 1
      %s202 = smul.addr %s201, 8
      %s203 = scalar_lea.vmem %s1, %s202
      %p204 = pneg %p62
      %p205 = pneg %p59
      %p206 = scmp.lt.s32.totalorder %s15, 1
      %s207 = scalar_select %p206, %s15, 1
      %s208 = smul.addr %s207, 8
      %s209 = scalar_lea.vmem %s2, %s208
      %p210 = pneg %p88
      %p211 = pneg %p85
      %p212 = scmp.lt.s32.totalorder %s15, 1
      %s213 = scalar_select %p212, %s15, 1
      %s214 = smul.addr %s213, 2
      %s215 = scalar_lea.vmem %s3, %s214
      %p216 = pneg %p114
      %p217 = pneg %p111
      %p218 = pneg %p140
      %p219 = pneg %p137
      %p220 = scmp.lt.s32.totalorder %s15, 1
      %s221 = scalar_select %p220, %s15, 1
      %s222 = smul.addr %s221, 8
      %s223 = scalar_lea.vmem %s4, %s222
      %p224 = scmp.lt.s32.totalorder %s15, 1
      %s225 = scalar_select %p224, %s15, 1
      %s226 = smul.addr %s225, 8
      %s227 = scalar_lea.vmem %s0, %s226
      %p228 = scmp.lt.s32.totalorder %s15, 1
      %s229 = scalar_select %p228, %s15, 1
      %s230 = smul.addr %s229, 8
      %s231 = scalar_lea.vmem %s1, %s230
      %p232 = scmp.lt.s32.totalorder %s15, 1
      %s233 = scalar_select %p232, %s15, 1
      %s234 = smul.addr %s233, 8
      %s235 = scalar_lea.vmem %s2, %s234
      %p236 = scmp.lt.s32.totalorder %s15, 1
      %s237 = scalar_select %p236, %s15, 1
      %s238 = smul.addr %s237, 2
      %s239 = scalar_lea.vmem %s3, %s238
      %p240 = scmp.lt.s32.totalorder %s15, 1
      %s241 = scalar_select %p240, %s15, 1
      %s242 = smul.addr %s241, 8
      %s243 = scalar_lea.vmem %s4, %s242
      %v245 = vld [vmem:[%s227] sm:$0xff]
      %v246 = vld [vmem:[%s231] sm:$0xff]
      %v247 = vld [vmem:[%s235] sm:$0xff]
      %v248 = vld [vmem:[%s239] sm:$0x3]
      %v249 = vunpack.c.0.s8 %v248
      %v250 = vcvt.s32.f32 %v249
      %v251 = vpack.c.bf16 %v245, %v245
      %v252 = vpack.c.bf16 %v246, %v246
      %v253 = vpack.c.bf16 %v247, %v247
      %vm254 = vcmask 64512
      %v256 = vsel %vm254, %v251, 0
      %v259 = vsel %vm254, %v252, 0
      %261 = vmatprep.subr.bf16.mxu0 0
      %262 = vmatpush1.bf16.xpose.msra.mxu0 0
      %263 = vmatprep.subr.bf16.mxu0 0
      %264 = vmatpush1.bf16.xpose.msra.mxu0 0
      %265 = vmatprep.subr.bf16.mxu0 0
      %266 = vmatpush1.bf16.xpose.msra.mxu0 0
      %267 = vmatprep.subr.bf16.mxu0 0
      %268 = vmatpush1.bf16.xpose.msra.mxu0 0
      %269 = vmatprep.subr.bf16.mxu0 0
      %270 = vmatpush1.bf16.xpose.msra.mxu0 0
      %271 = vmatprep.subr.bf16.mxu0 0
      %272 = vmatpush1.bf16.xpose.msra.mxu0 0
      %273 = vmatprep.subr.bf16.mxu0 0
      %274 = vmatpush1.bf16.xpose.msra.mxu0 0
      %275 = vmatprep.subr.bf16.mxu0 0
      %276 = vmatpush1.bf16.xpose.msra.mxu0 %v259
      %277 = vmatprep.subr.bf16.mxu0 0
      %278 = vmatpush2.bf16.xpose.msra.mxu0 0
      %279 = vmatprep.subr.bf16.mxu0 0
      %280 = vmatpush2.bf16.xpose.msra.mxu0 0
      %281 = vmatprep.subr.bf16.mxu0 0
      %282 = vmatpush2.bf16.xpose.msra.mxu0 0
      %283 = vmatprep.subr.bf16.mxu0 0
      %284 = vmatpush2.bf16.xpose.msra.mxu0 0
      %285 = vmatprep.subr.bf16.mxu0 0
      %286 = vmatpush2.bf16.xpose.msra.mxu0 0
      %287 = vmatprep.subr.bf16.mxu0 0
      %288 = vmatpush2.bf16.xpose.msra.mxu0 0
      %289 = vmatprep.subr.bf16.mxu0 0
      %290 = vmatpush2.bf16.xpose.msra.mxu0 0
      %291 = vmatprep.subr.bf16.mxu0 0
      %292 = vmatpush2.bf16.xpose.msra.mxu0 0
      %293 = vmatprep.mubr.bf16.mxu0 0
      %294 = vmatmul.mubr.bf16.gmra.mxu0 %v256
      %v295 = vpop.f32.mrf.mxu0
      %v296 = vadd.f32 0.0, %v295
      %v297 = vpop.f32.mrf.mxu0
      %v298 = vpop.f32.mrf.mxu0
      %v299 = vpop.f32.mrf.mxu0
      %300 = vdwg.mxu0
      %v301 = vmul.f32 %v296, 0.35355338
      %vm302 = vcmp.eq.f32.partialorder %v250, 0.0
      %v303 = vsel %vm302, -1e+09, %v301
      %v304 = vsel %vm254, %v303, -inf
      %305 = vmax.xlane.f32.xlu0 %v304
      %v306 = vpop.xlane.xlu0 %305
      %v307 = vsub.f32 %v303, %v306
      %v308 = vmul.f32 %v307, 1.442695
      %v309 = vpow.pop %v308
      %v310 = vsel %vm254, %v309, 0.0
      %311 = vadd.xlane.f32.xlu0 %v310
      %v312 = vpop.xlane.xlu0 %311
      %v313 = vrcp.pop %v312
      %v314 = vmul.f32 %v309, %v313
      %v315 = vpack.c.bf16 %v314, %v314
      %v317 = vsel %vm254, %v315, 0
      %vm319 = vcmask 1043456
      %v321 = vsel %vm319, %v253, 0
      %323 = vmatprep.subr.bf16.mxu0 0
      %324 = vmatpush1.bf16.msra.mxu0 0
      %325 = vmatprep.subr.bf16.mxu0 0
      %326 = vmatpush1.bf16.msra.mxu0 0
      %327 = vmatprep.subr.bf16.mxu0 0
      %328 = vmatpush1.bf16.msra.mxu0 0
      %329 = vmatprep.subr.bf16.mxu0 0
      %330 = vmatpush1.bf16.msra.mxu0 0
      %331 = vmatprep.subr.bf16.mxu0 0
      %332 = vmatpush1.bf16.msra.mxu0 0
      %333 = vmatprep.subr.bf16.mxu0 0
      %334 = vmatpush1.bf16.msra.mxu0 0
      %335 = vmatprep.subr.bf16.mxu0 0
      %336 = vmatpush1.bf16.msra.mxu0 0
      %337 = vmatprep.subr.bf16.mxu0 0
      %338 = vmatpush1.bf16.msra.mxu0 %v321
      %339 = vmatprep.subr.bf16.mxu0 0
      %340 = vmatpush2.bf16.msra.mxu0 0
      %341 = vmatprep.subr.bf16.mxu0 0
      %342 = vmatpush2.bf16.msra.mxu0 0
      %343 = vmatprep.subr.bf16.mxu0 0
      %344 = vmatpush2.bf16.msra.mxu0 0
      %345 = vmatprep.subr.bf16.mxu0 0
      %346 = vmatpush2.bf16.msra.mxu0 0
      %347 = vmatprep.subr.bf16.mxu0 0
      %348 = vmatpush2.bf16.msra.mxu0 0
      %349 = vmatprep.subr.bf16.mxu0 0
      %350 = vmatpush2.bf16.msra.mxu0 0
      %351 = vmatprep.subr.bf16.mxu0 0
      %352 = vmatpush2.bf16.msra.mxu0 0
      %353 = vmatprep.subr.bf16.mxu0 0
      %354 = vmatpush2.bf16.msra.mxu0 0
      %355 = vmatprep.mubr.bf16.mxu0 0
      %356 = vmatmul.mubr.bf16.gmra.mxu0 %v317
      %v357 = vpop.f32.mrf.mxu0
      %v358 = vadd.f32 0.0, %v357
      %v359 = vpop.f32.mrf.mxu0
      %v360 = vpop.f32.mrf.mxu0
      %v361 = vpop.f32.mrf.mxu0
      %362 = vdwg.mxu0
      %364 = vrot.lane.b32.xlu0 %v251, 120
      %v365 = vpop.permute.xlu0 %364
      %367 = vrot.lane.b32.xlu0 %v252, 120
      %v368 = vpop.permute.xlu0 %367
      %v370 = vsel %vm254, %v365, 0
      %v373 = vsel %vm254, %v368, 0
      %375 = vmatprep.subr.bf16.mxu0 0
      %376 = vmatpush1.bf16.xpose.msra.mxu0 0
      %377 = vmatprep.subr.bf16.mxu0 0
      %378 = vmatpush1.bf16.xpose.msra.mxu0 0
      %379 = vmatprep.subr.bf16.mxu0 0
      %380 = vmatpush1.bf16.xpose.msra.mxu0 0
      %381 = vmatprep.subr.bf16.mxu0 0
      %382 = vmatpush1.bf16.xpose.msra.mxu0 0
      %383 = vmatprep.subr.bf16.mxu0 0
      %384 = vmatpush1.bf16.xpose.msra.mxu0 0
      %385 = vmatprep.subr.bf16.mxu0 0
      %386 = vmatpush1.bf16.xpose.msra.mxu0 0
      %387 = vmatprep.subr.bf16.mxu0 0
      %388 = vmatpush1.bf16.xpose.msra.mxu0 0
      %389 = vmatprep.subr.bf16.mxu0 0
      %390 = vmatpush1.bf16.xpose.msra.mxu0 %v373
      %391 = vmatprep.subr.bf16.mxu0 0
      %392 = vmatpush2.bf16.xpose.msra.mxu0 0
      %393 = vmatprep.subr.bf16.mxu0 0
      %394 = vmatpush2.bf16.xpose.msra.mxu0 0
      %395 = vmatprep.subr.bf16.mxu0 0
      %396 = vmatpush2.bf16.xpose.msra.mxu0 0
      %397 = vmatprep.subr.bf16.mxu0 0
      %398 = vmatpush2.bf16.xpose.msra.mxu0 0
      %399 = vmatprep.subr.bf16.mxu0 0
      %400 = vmatpush2.bf16.xpose.msra.mxu0 0
      %401 = vmatprep.subr.bf16.mxu0 0
      %402 = vmatpush2.bf16.xpose.msra.mxu0 0
      %403 = vmatprep.subr.bf16.mxu0 0
      %404 = vmatpush2.bf16.xpose.msra.mxu0 0
      %405 = vmatprep.subr.bf16.mxu0 0
      %406 = vmatpush2.bf16.xpose.msra.mxu0 0
      %407 = vmatprep.mubr.bf16.mxu0 0
      %408 = vmatmul.mubr.bf16.gmra.mxu0 %v370
      %v409 = vpop.f32.mrf.mxu0
      %v410 = vadd.f32 0.0, %v409
      %v411 = vpop.f32.mrf.mxu0
      %v412 = vpop.f32.mrf.mxu0
      %v413 = vpop.f32.mrf.mxu0
      %414 = vdwg.mxu0
      %v415 = vmul.f32 %v410, 0.35355338
      %v416 = vsel %vm302, -1e+09, %v415
      %v417 = vsel %vm254, %v416, -inf
      %418 = vmax.xlane.f32.xlu0 %v417
      %v419 = vpop.xlane.xlu0 %418
      %v420 = vsub.f32 %v416, %v419
      %v421 = vmul.f32 %v420, 1.442695
      %v422 = vpow.pop %v421
      %v423 = vsel %vm254, %v422, 0.0
      %424 = vadd.xlane.f32.xlu0 %v423
      %v425 = vpop.xlane.xlu0 %424
      %v426 = vrcp.pop %v425
      %v427 = vmul.f32 %v422, %v426
      %v428 = vpack.c.bf16 %v427, %v427
      %430 = vrot.lane.b32.xlu0 %v253, 120
      %v431 = vpop.permute.xlu0 %430
      %v433 = vsel %vm254, %v428, 0
      %v436 = vsel %vm319, %v431, 0
      %438 = vmatprep.subr.bf16.mxu0 0
      %439 = vmatpush1.bf16.msra.mxu0 0
      %440 = vmatprep.subr.bf16.mxu0 0
      %441 = vmatpush1.bf16.msra.mxu0 0
      %442 = vmatprep.subr.bf16.mxu0 0
      %443 = vmatpush1.bf16.msra.mxu0 0
      %444 = vmatprep.subr.bf16.mxu0 0
      %445 = vmatpush1.bf16.msra.mxu0 0
      %446 = vmatprep.subr.bf16.mxu0 0
      %447 = vmatpush1.bf16.msra.mxu0 0
      %448 = vmatprep.subr.bf16.mxu0 0
      %449 = vmatpush1.bf16.msra.mxu0 0
      %450 = vmatprep.subr.bf16.mxu0 0
      %451 = vmatpush1.bf16.msra.mxu0 0
      %452 = vmatprep.subr.bf16.mxu0 0
      %453 = vmatpush1.bf16.msra.mxu0 %v436
      %454 = vmatprep.subr.bf16.mxu0 0
      %455 = vmatpush2.bf16.msra.mxu0 0
      %456 = vmatprep.subr.bf16.mxu0 0
      %457 = vmatpush2.bf16.msra.mxu0 0
      %458 = vmatprep.subr.bf16.mxu0 0
      %459 = vmatpush2.bf16.msra.mxu0 0
      %460 = vmatprep.subr.bf16.mxu0 0
      %461 = vmatpush2.bf16.msra.mxu0 0
      %462 = vmatprep.subr.bf16.mxu0 0
      %463 = vmatpush2.bf16.msra.mxu0 0
      %464 = vmatprep.subr.bf16.mxu0 0
      %465 = vmatpush2.bf16.msra.mxu0 0
      %466 = vmatprep.subr.bf16.mxu0 0
      %467 = vmatpush2.bf16.msra.mxu0 0
      %468 = vmatprep.subr.bf16.mxu0 0
      %469 = vmatpush2.bf16.msra.mxu0 0
      %470 = vmatprep.mubr.bf16.mxu0 0
      %471 = vmatmul.mubr.bf16.gmra.mxu0 %v433
      %v472 = vpop.f32.mrf.mxu0
      %v473 = vadd.f32 0.0, %v472
      %v474 = vpop.f32.mrf.mxu0
      %v475 = vpop.f32.mrf.mxu0
      %v476 = vpop.f32.mrf.mxu0
      %477 = vdwg.mxu0
      %478 = vrot.lane.b32.xlu0 %v251, 112
      %v479 = vpop.permute.xlu0 %478
      %480 = vrot.lane.b32.xlu0 %v252, 112
      %v481 = vpop.permute.xlu0 %480
      %v483 = vsel %vm254, %v479, 0
      %v486 = vsel %vm254, %v481, 0
      %488 = vmatprep.subr.bf16.mxu0 0
      %489 = vmatpush1.bf16.xpose.msra.mxu0 0
      %490 = vmatprep.subr.bf16.mxu0 0
      %491 = vmatpush1.bf16.xpose.msra.mxu0 0
      %492 = vmatprep.subr.bf16.mxu0 0
      %493 = vmatpush1.bf16.xpose.msra.mxu0 0
      %494 = vmatprep.subr.bf16.mxu0 0
      %495 = vmatpush1.bf16.xpose.msra.mxu0 0
      %496 = vmatprep.subr.bf16.mxu0 0
      %497 = vmatpush1.bf16.xpose.msra.mxu0 0
      %498 = vmatprep.subr.bf16.mxu0 0
      %499 = vmatpush1.bf16.xpose.msra.mxu0 0
      %500 = vmatprep.subr.bf16.mxu0 0
      %501 = vmatpush1.bf16.xpose.msra.mxu0 0
      %502 = vmatprep.subr.bf16.mxu0 0
      %503 = vmatpush1.bf16.xpose.msra.mxu0 %v486
      %504 = vmatprep.subr.bf16.mxu0 0
      %505 = vmatpush2.bf16.xpose.msra.mxu0 0
      %506 = vmatprep.subr.bf16.mxu0 0
      %507 = vmatpush2.bf16.xpose.msra.mxu0 0
      %508 = vmatprep.subr.bf16.mxu0 0
      %509 = vmatpush2.bf16.xpose.msra.mxu0 0
      %510 = vmatprep.subr.bf16.mxu0 0
      %511 = vmatpush2.bf16.xpose.msra.mxu0 0
      %512 = vmatprep.subr.bf16.mxu0 0
      %513 = vmatpush2.bf16.xpose.msra.mxu0 0
      %514 = vmatprep.subr.bf16.mxu0 0
      %515 = vmatpush2.bf16.xpose.msra.mxu0 0
      %516 = vmatprep.subr.bf16.mxu0 0
      %517 = vmatpush2.bf16.xpose.msra.mxu0 0
      %518 = vmatprep.subr.bf16.mxu0 0
      %519 = vmatpush2.bf16.xpose.msra.mxu0 0
      %520 = vmatprep.mubr.bf16.mxu0 0
      %521 = vmatmul.mubr.bf16.gmra.mxu0 %v483
      %v522 = vpop.f32.mrf.mxu0
      %v523 = vadd.f32 0.0, %v522
      %v524 = vpop.f32.mrf.mxu0
      %v525 = vpop.f32.mrf.mxu0
      %v526 = vpop.f32.mrf.mxu0
      %527 = vdwg.mxu0
      %v528 = vmul.f32 %v523, 0.35355338
      %v529 = vsel %vm302, -1e+09, %v528
      %v530 = vsel %vm254, %v529, -inf
      %531 = vmax.xlane.f32.xlu0 %v530
      %v532 = vpop.xlane.xlu0 %531
      %v533 = vsub.f32 %v529, %v532
      %v534 = vmul.f32 %v533, 1.442695
      %v535 = vpow.pop %v534
      %v536 = vsel %vm254, %v535, 0.0
      %537 = vadd.xlane.f32.xlu0 %v536
      %v538 = vpop.xlane.xlu0 %537
      %v539 = vrcp.pop %v538
      %v540 = vmul.f32 %v535, %v539
      %v541 = vpack.c.bf16 %v540, %v540
      %542 = vrot.lane.b32.xlu0 %v253, 112
      %v543 = vpop.permute.xlu0 %542
      %v545 = vsel %vm254, %v541, 0
      %v548 = vsel %vm319, %v543, 0
      %550 = vmatprep.subr.bf16.mxu0 0
      %551 = vmatpush1.bf16.msra.mxu0 0
      %552 = vmatprep.subr.bf16.mxu0 0
      %553 = vmatpush1.bf16.msra.mxu0 0
      %554 = vmatprep.subr.bf16.mxu0 0
      %555 = vmatpush1.bf16.msra.mxu0 0
      %556 = vmatprep.subr.bf16.mxu0 0
      %557 = vmatpush1.bf16.msra.mxu0 0
      %558 = vmatprep.subr.bf16.mxu0 0
      %559 = vmatpush1.bf16.msra.mxu0 0
      %560 = vmatprep.subr.bf16.mxu0 0
      %561 = vmatpush1.bf16.msra.mxu0 0
      %562 = vmatprep.subr.bf16.mxu0 0
      %563 = vmatpush1.bf16.msra.mxu0 0
      %564 = vmatprep.subr.bf16.mxu0 0
      %565 = vmatpush1.bf16.msra.mxu0 %v548
      %566 = vmatprep.subr.bf16.mxu0 0
      %567 = vmatpush2.bf16.msra.mxu0 0
      %568 = vmatprep.subr.bf16.mxu0 0
      %569 = vmatpush2.bf16.msra.mxu0 0
      %570 = vmatprep.subr.bf16.mxu0 0
      %571 = vmatpush2.bf16.msra.mxu0 0
      %572 = vmatprep.subr.bf16.mxu0 0
      %573 = vmatpush2.bf16.msra.mxu0 0
      %574 = vmatprep.subr.bf16.mxu0 0
      %575 = vmatpush2.bf16.msra.mxu0 0
      %576 = vmatprep.subr.bf16.mxu0 0
      %577 = vmatpush2.bf16.msra.mxu0 0
      %578 = vmatprep.subr.bf16.mxu0 0
      %579 = vmatpush2.bf16.msra.mxu0 0
      %580 = vmatprep.subr.bf16.mxu0 0
      %581 = vmatpush2.bf16.msra.mxu0 0
      %582 = vmatprep.mubr.bf16.mxu0 0
      %583 = vmatmul.mubr.bf16.gmra.mxu0 %v545
      %v584 = vpop.f32.mrf.mxu0
      %v585 = vadd.f32 0.0, %v584
      %v586 = vpop.f32.mrf.mxu0
      %v587 = vpop.f32.mrf.mxu0
      %v588 = vpop.f32.mrf.mxu0
      %589 = vdwg.mxu0
      %590 = vrot.lane.b32.xlu0 %v251, 104
      %v591 = vpop.permute.xlu0 %590
      %592 = vrot.lane.b32.xlu0 %v252, 104
      %v593 = vpop.permute.xlu0 %592
      %v595 = vsel %vm254, %v591, 0
      %v598 = vsel %vm254, %v593, 0
      %600 = vmatprep.subr.bf16.mxu0 0
      %601 = vmatpush1.bf16.xpose.msra.mxu0 0
      %602 = vmatprep.subr.bf16.mxu0 0
      %603 = vmatpush1.bf16.xpose.msra.mxu0 0
      %604 = vmatprep.subr.bf16.mxu0 0
      %605 = vmatpush1.bf16.xpose.msra.mxu0 0
      %606 = vmatprep.subr.bf16.mxu0 0
      %607 = vmatpush1.bf16.xpose.msra.mxu0 0
      %608 = vmatprep.subr.bf16.mxu0 0
      %609 = vmatpush1.bf16.xpose.msra.mxu0 0
      %610 = vmatprep.subr.bf16.mxu0 0
      %611 = vmatpush1.bf16.xpose.msra.mxu0 0
      %612 = vmatprep.subr.bf16.mxu0 0
      %613 = vmatpush1.bf16.xpose.msra.mxu0 0
      %614 = vmatprep.subr.bf16.mxu0 0
      %615 = vmatpush1.bf16.xpose.msra.mxu0 %v598
      %616 = vmatprep.subr.bf16.mxu0 0
      %617 = vmatpush2.bf16.xpose.msra.mxu0 0
      %618 = vmatprep.subr.bf16.mxu0 0
      %619 = vmatpush2.bf16.xpose.msra.mxu0 0
      %620 = vmatprep.subr.bf16.mxu0 0
      %621 = vmatpush2.bf16.xpose.msra.mxu0 0
      %622 = vmatprep.subr.bf16.mxu0 0
      %623 = vmatpush2.bf16.xpose.msra.mxu0 0
      %624 = vmatprep.subr.bf16.mxu0 0
      %625 = vmatpush2.bf16.xpose.msra.mxu0 0
      %626 = vmatprep.subr.bf16.mxu0 0
      %627 = vmatpush2.bf16.xpose.msra.mxu0 0
      %628 = vmatprep.subr.bf16.mxu0 0
      %629 = vmatpush2.bf16.xpose.msra.mxu0 0
      %630 = vmatprep.subr.bf16.mxu0 0
      %631 = vmatpush2.bf16.xpose.msra.mxu0 0
      %632 = vmatprep.mubr.bf16.mxu0 0
      %633 = vmatmul.mubr.bf16.gmra.mxu0 %v595
      %v634 = vpop.f32.mrf.mxu0
      %v635 = vadd.f32 0.0, %v634
      %v636 = vpop.f32.mrf.mxu0
      %v637 = vpop.f32.mrf.mxu0
      %v638 = vpop.f32.mrf.mxu0
      %639 = vdwg.mxu0
      %v640 = vmul.f32 %v635, 0.35355338
      %v641 = vsel %vm302, -1e+09, %v640
      %v642 = vsel %vm254, %v641, -inf
      %643 = vmax.xlane.f32.xlu0 %v642
      %v644 = vpop.xlane.xlu0 %643
      %v645 = vsub.f32 %v641, %v644
      %v646 = vmul.f32 %v645, 1.442695
      %v647 = vpow.pop %v646
      %v648 = vsel %vm254, %v647, 0.0
      %649 = vadd.xlane.f32.xlu0 %v648
      %v650 = vpop.xlane.xlu0 %649
      %v651 = vrcp.pop %v650
      %v652 = vmul.f32 %v647, %v651
      %v653 = vpack.c.bf16 %v652, %v652
      %654 = vrot.lane.b32.xlu0 %v253, 104
      %v655 = vpop.permute.xlu0 %654
      %v657 = vsel %vm254, %v653, 0
      %v660 = vsel %vm319, %v655, 0
      %662 = vmatprep.subr.bf16.mxu0 0
      %663 = vmatpush1.bf16.msra.mxu0 0
      %664 = vmatprep.subr.bf16.mxu0 0
      %665 = vmatpush1.bf16.msra.mxu0 0
      %666 = vmatprep.subr.bf16.mxu0 0
      %667 = vmatpush1.bf16.msra.mxu0 0
      %668 = vmatprep.subr.bf16.mxu0 0
      %669 = vmatpush1.bf16.msra.mxu0 0
      %670 = vmatprep.subr.bf16.mxu0 0
      %671 = vmatpush1.bf16.msra.mxu0 0
      %672 = vmatprep.subr.bf16.mxu0 0
      %673 = vmatpush1.bf16.msra.mxu0 0
      %674 = vmatprep.subr.bf16.mxu0 0
      %675 = vmatpush1.bf16.msra.mxu0 0
      %676 = vmatprep.subr.bf16.mxu0 0
      %677 = vmatpush1.bf16.msra.mxu0 %v660
      %678 = vmatprep.subr.bf16.mxu0 0
      %679 = vmatpush2.bf16.msra.mxu0 0
      %680 = vmatprep.subr.bf16.mxu0 0
      %681 = vmatpush2.bf16.msra.mxu0 0
      %682 = vmatprep.subr.bf16.mxu0 0
      %683 = vmatpush2.bf16.msra.mxu0 0
      %684 = vmatprep.subr.bf16.mxu0 0
      %685 = vmatpush2.bf16.msra.mxu0 0
      %686 = vmatprep.subr.bf16.mxu0 0
      %687 = vmatpush2.bf16.msra.mxu0 0
      %688 = vmatprep.subr.bf16.mxu0 0
      %689 = vmatpush2.bf16.msra.mxu0 0
      %690 = vmatprep.subr.bf16.mxu0 0
      %691 = vmatpush2.bf16.msra.mxu0 0
      %692 = vmatprep.subr.bf16.mxu0 0
      %693 = vmatpush2.bf16.msra.mxu0 0
      %694 = vmatprep.mubr.bf16.mxu0 0
      %695 = vmatmul.mubr.bf16.gmra.mxu0 %v657
      %v696 = vpop.f32.mrf.mxu0
      %v697 = vadd.f32 0.0, %v696
      %v698 = vpop.f32.mrf.mxu0
      %v699 = vpop.f32.mrf.mxu0
      %v700 = vpop.f32.mrf.mxu0
      %701 = vdwg.mxu0
      %703 = vrot.lane.b32.xlu0 %v473, 8
      %v704 = vpop.permute.xlu0 %703
      %707 = vrot.lane.b32.xlu0 %v585, 16
      %v708 = vpop.permute.xlu0 %707
      %711 = vrot.lane.b32.xlu0 %v697, 24
      %v712 = vpop.permute.xlu0 %711
      %v714 = vsel %vm254, %v358, %v704
      %vm715 = vcmask 130048
      %v716 = vsel %vm715, %v714, %v708
      %vm717 = vcmask 195584
      %v718 = vsel %vm717, %v716, %v712
      %vm719 = vcmask 261120
      %720 = vst.msk [vmem:[%s243] sm:$0xff] %vm719, %v718
      %p721 = scmp.lt.s32.totalorder %s15, 1
      %s722 = scalar_select %p721, %s15, 1
      %s723 = smul.addr %s722, 8
      %s724 = scalar_lea.vmem %s4, %s723
      // Predicated region
      $region37: #{_lambda_.58} parent=35 // pred_check
        %p725 = pneg %p137
      $region38: #{_lambda_.58} parent=35 // pred_check_branch
        %727 = sbr.rel (%p725) target = $region40
      $region39: #{_lambda_.58} parent=35 // pred_region
        _
      $region40: #{_lambda_.58} parent=35 // pred_fallthru
        _
    $region36: #{_lambda_.58} parent=5 // pred_fallthru
      _
    %p728 = scmp.le.s32.totalorder 2, %s10
    // Predicated region
    $region41: #{_lambda_.58} parent=5 // pred_check
      %p729 = pneg %p728
    $region42: #{_lambda_.58} parent=5 // pred_check_branch
      %731 = sbr.rel (%p729) target = $region44
    $region43: #{_lambda_.58} parent=5 // pred_region
      %s732 = ssub.s32 %s10, 2
      // Predicated region
      $region45: #{_lambda_.58} parent=43 // pred_check
        %p733 = pneg %p143
      $region46: #{_lambda_.58} parent=43 // pred_check_branch
        %735 = sbr.rel (%p733) target = $region48
      $region47: #{_lambda_.58} parent=43 // pred_region
        %p736 = scmp.lt.s32.totalorder %s16, 1
        %s737 = scalar_select %p736, %s16, 1
        %s738 = smul.addr %s737, 8
        %s739 = scalar_lea.vmem %s4, %s738
      $region48: #{_lambda_.58} parent=43 // pred_fallthru
        _
    $region44: #{_lambda_.58} parent=5 // pred_fallthru
      _
  $region6: #{_lambda_.58} parent=0 // loop_footer
    %s14 = sadd.s32 1, %s10
  $region7: #{_lambda_.58} parent=0 // loop_footer_branch
    %9 = sbr.rel target = $region3
  $region8: #{_lambda_.58} parent=0 // loop_exit
    _

// kernel: _lambda_.46
$region0: #{_lambda_.46}
  #allocation0 [shape = 'u32[]', space=smem, size = 0x4, offset = 0x4, fixed_abs, tag = 'smem constant byte address 0x4 - core index']
  #allocation1 [shape = 'u32[144,128]{1,0:T(1,128)}', space=vmem, size = 0x12000, scoped, tag = 'internal scratch']
  #allocation2 [shape = 'f32[16,64]{1,0:T(8,128)}', space=vmem, size = 0x2000, scoped, tag = 'scratch operand']
  %s0 = inlined_call_operand.vmem [shape: f32[16,32], index: 0, kind: input, shape index: {}]
  %s1 = inlined_call_operand.vmem [shape: bf16[32,64], index: 1, kind: input, shape index: {}]
  %s2 = inlined_call_operand.vmem [shape: f32[1,64], index: 2, kind: input, shape index: {}]
  %s3 = inlined_call_operand.vmem [shape: f32[16,64], index: 3, kind: output, shape index: {}]
  %s4 = sld [smem:[#allocation0]]
  $region30: #{_lambda_.46} parent=0
    _
  %s6 = ssub.s32 1, %s4
  %s7 = scalar_select 0, %s6, %s4
  // Predicated region
  $region2: #{_lambda_.46} parent=0 // pred_check
    _
  $region3: #{_lambda_.46} parent=0 // pred_check_branch
    %9 = sbr.rel (0) target = $region5
  $region4: #{_lambda_.46} parent=0 // pred_region
    _
  $region5: #{_lambda_.46} parent=0 // pred_fallthru
    _
  // Predicated region
  $region6: #{_lambda_.46} parent=0 // pred_check
    _
  $region7: #{_lambda_.46} parent=0 // pred_check_branch
    %11 = sbr.rel (0) target = $region9
  $region8: #{_lambda_.46} parent=0 // pred_region
    _
  $region9: #{_lambda_.46} parent=0 // pred_fallthru
    _
  // Predicated region
  $region10: #{_lambda_.46} parent=0 // pred_check
    _
  $region11: #{_lambda_.46} parent=0 // pred_check_branch
    %13 = sbr.rel (0) target = $region13
  $region12: #{_lambda_.46} parent=0 // pred_region
    _
  $region13: #{_lambda_.46} parent=0 // pred_fallthru
    _
  %p15 = scmp.eq.s32.totalorder 0, 0
  // Predicated region
  $region14: #{_lambda_.46} parent=0 // pred_check
    %p16 = pneg %p15
  $region15: #{_lambda_.46} parent=0 // pred_check_branch
    %18 = sbr.rel (%p16) target = $region17
  $region16: #{_lambda_.46} parent=0 // pred_region
    %vm19 = vcmask 523264
    %20 = vst.msk [vmem:[#allocation2] sm:$0xff] %vm19, 0.0
    %21 = vst.msk [vmem:[#allocation2 + $0x8] sm:$0xff] %vm19, 0.0
  $region17: #{_lambda_.46} parent=0 // pred_fallthru
    _
  %v22 = vld [vmem:[#allocation2] sm:$0xff]
  %v23 = vld [vmem:[#allocation2 + $0x8] sm:$0xff]
  %v24 = vld [vmem:[%s0] sm:$0xff]
  %v25 = vld [vmem:[%s0 + $0x8] sm:$0xff]
  %v26 = vpack.c.bf16 %v25, %v24
  %v27 = vld [vmem:[%s1] sm:$0xf]
  %v28 = vld [vmem:[%s1 + $0x4] sm:$0xf]
  %v29 = vld [vmem:[%s1 + $0x8] sm:$0xf]
  %v30 = vld [vmem:[%s1 + $0xc] sm:$0xf]
  %v35 = vunpack.c.l.b16 %v27
  %v36 = vunpack.c.l.b16 %v28
  %v37 = vunpack.c.l.b16 %v29
  %v38 = vunpack.c.l.b16 %v30
  %v39 = vpack.c.b16 %v36, %v35
  %v40 = vpack.c.b16 %v38, %v37
  %vm43 = vcmask 261120
  %v45 = vsel %vm43, %v26, 0
  %47 = vmatprep.subr.bf16.mxu0 0
  %48 = vmatpush1.bf16.msra.mxu0 0
  %49 = vmatprep.subr.bf16.mxu0 0
  %50 = vmatpush1.bf16.msra.mxu0 0
  %51 = vmatprep.subr.bf16.mxu0 0
  %52 = vmatpush1.bf16.msra.mxu0 0
  %53 = vmatprep.subr.bf16.mxu0 0
  %54 = vmatpush1.bf16.msra.mxu0 0
  %55 = vmatprep.subr.bf16.mxu0 0
  %56 = vmatpush1.bf16.msra.mxu0 0
  %57 = vmatprep.subr.bf16.mxu0 0
  %58 = vmatpush1.bf16.msra.mxu0 0
  %59 = vmatprep.subr.bf16.mxu0 0
  %60 = vmatpush1.bf16.msra.mxu0 %v40
  %61 = vmatprep.subr.bf16.mxu0 0
  %62 = vmatpush1.bf16.msra.mxu0 %v39
  %63 = vmatprep.subr.bf16.mxu0 0
  %64 = vmatpush2.bf16.msra.mxu0 0
  %65 = vmatprep.subr.bf16.mxu0 0
  %66 = vmatpush2.bf16.msra.mxu0 0
  %67 = vmatprep.subr.bf16.mxu0 0
  %68 = vmatpush2.bf16.msra.mxu0 0
  %69 = vmatprep.subr.bf16.mxu0 0
  %70 = vmatpush2.bf16.msra.mxu0 0
  %71 = vmatprep.subr.bf16.mxu0 0
  %72 = vmatpush2.bf16.msra.mxu0 0
  %73 = vmatprep.subr.bf16.mxu0 0
  %74 = vmatpush2.bf16.msra.mxu0 0
  %75 = vmatprep.subr.bf16.mxu0 0
  %76 = vmatpush2.bf16.msra.mxu0 0
  %77 = vmatprep.subr.bf16.mxu0 0
  %78 = vmatpush2.bf16.msra.mxu0 0
  %79 = vmatprep.mubr.bf16.mxu0 0
  %80 = vmatmul.mubr.bf16.gmra.mxu0 %v45
  %v81 = vpop.f32.mrf.mxu0
  %v82 = vadd.f32 0.0, %v81
  %v83 = vpop.f32.mrf.mxu0
  %v84 = vpop.f32.mrf.mxu0
  %v85 = vadd.f32 0.0, %v84
  %v86 = vpop.f32.mrf.mxu0
  %87 = vdwg.mxu0
  %v88 = vadd.f32 %v22, %v82
  %v89 = vadd.f32 %v23, %v85
  %vm90 = vcmask 523264
  %91 = vst.msk [vmem:[#allocation2] sm:$0xff] %vm90, %v88
  %92 = vst.msk [vmem:[#allocation2 + $0x8] sm:$0xff] %vm90, %v89
  // Predicated region
  $region18: #{_lambda_.46} parent=0 // pred_check
    %p93 = pneg %p15
  $region19: #{_lambda_.46} parent=0 // pred_check_branch
    %95 = sbr.rel (%p93) target = $region21
  $region20: #{_lambda_.46} parent=0 // pred_region
    %v96 = vld [vmem:[#allocation2] sm:$0xff]
    %v97 = vld [vmem:[#allocation2 + $0x8] sm:$0xff]
    %v98 = vld [vmem:[%s2] sm:$0x1]
    %v100 = vlaneseq
    %v101 = vshrl.u32 %v100, 7
    %v102 = vsub.s32 0, %v101
    %v103 = vrot.slane %v98, %v102
    %v105 = vadd.f32 %v96, %v103
    %v106 = vadd.f32 %v97, %v103
    %v107 = vmax.f32 %v105, 0.0
    %v108 = vmax.f32 %v106, 0.0
    %109 = vst.msk [vmem:[%s3] sm:$0xff] %vm90, %v107
    %110 = vst.msk [vmem:[%s3 + $0x8] sm:$0xff] %vm90, %v108
  $region21: #{_lambda_.46} parent=0 // pred_fallthru
    _
  // Predicated region
  $region22: #{_lambda_.46} parent=0 // pred_check
    _
  $region23: #{_lambda_.46} parent=0 // pred_check_branch
    %112 = sbr.rel (0) target = $region25
  $region24: #{_lambda_.46} parent=0 // pred_region
    _
  $region25: #{_lambda_.46} parent=0 // pred_fallthru
    _
  // Predicated region
  $region26: #{_lambda_.46} parent=0 // pred_check
    _
  $region27: #{_lambda_.46} parent=0 // pred_check_branch
    %114 = sbr.rel (0) target = $region29
  $region28: #{_lambda_.46} parent=0 // pred_region
    _
  $region29: #{_lambda_.46} parent=0 // pred_fallthru
    _

// kernel: _lambda_.62
$region0: #{_lambda_.62}
  #allocation0 [shape = 'u32[]', space=smem, size = 0x4, offset = 0x4, fixed_abs, tag = 'smem constant byte address 0x4 - core index']
  #allocation1 [shape = 'u32[144,128]{1,0:T(1,128)}', space=vmem, size = 0x12000, scoped, tag = 'internal scratch']
  #allocation2 [shape = 'f32[16,64]{1,0:T(8,128)}', space=vmem, size = 0x2000, scoped, tag = 'scratch operand']
  %s0 = inlined_call_operand.vmem [shape: f32[16,32], index: 0, kind: input, shape index: {}]
  %s1 = inlined_call_operand.vmem [shape: bf16[32,64], index: 1, kind: input, shape index: {}]
  %s2 = inlined_call_operand.vmem [shape: f32[1,64], index: 2, kind: input, shape index: {}]
  %s3 = inlined_call_operand.vmem [shape: f32[16,64], index: 3, kind: output, shape index: {}]
  %s4 = sld [smem:[#allocation0]]
  $region30: #{_lambda_.62} parent=0
    _
  %s6 = ssub.s32 1, %s4
  %s7 = scalar_select 0, %s6, %s4
  // Predicated region
  $region2: #{_lambda_.62} parent=0 // pred_check
    _
  $region3: #{_lambda_.62} parent=0 // pred_check_branch
    %9 = sbr.rel (0) target = $region5
  $region4: #{_lambda_.62} parent=0 // pred_region
    _
  $region5: #{_lambda_.62} parent=0 // pred_fallthru
    _
  // Predicated region
  $region6: #{_lambda_.62} parent=0 // pred_check
    _
  $region7: #{_lambda_.62} parent=0 // pred_check_branch
    %11 = sbr.rel (0) target = $region9
  $region8: #{_lambda_.62} parent=0 // pred_region
    _
  $region9: #{_lambda_.62} parent=0 // pred_fallthru
    _
  // Predicated region
  $region10: #{_lambda_.62} parent=0 // pred_check
    _
  $region11: #{_lambda_.62} parent=0 // pred_check_branch
    %13 = sbr.rel (0) target = $region13
  $region12: #{_lambda_.62} parent=0 // pred_region
    _
  $region13: #{_lambda_.62} parent=0 // pred_fallthru
    _
  %p15 = scmp.eq.s32.totalorder 0, 0
  // Predicated region
  $region14: #{_lambda_.62} parent=0 // pred_check
    %p16 = pneg %p15
  $region15: #{_lambda_.62} parent=0 // pred_check_branch
    %18 = sbr.rel (%p16) target = $region17
  $region16: #{_lambda_.62} parent=0 // pred_region
    %vm19 = vcmask 523264
    %20 = vst.msk [vmem:[#allocation2] sm:$0xff] %vm19, 0.0
    %21 = vst.msk [vmem:[#allocation2 + $0x8] sm:$0xff] %vm19, 0.0
  $region17: #{_lambda_.62} parent=0 // pred_fallthru
    _
  %v22 = vld [vmem:[#allocation2] sm:$0xff]
  %v23 = vld [vmem:[#allocation2 + $0x8] sm:$0xff]
  %v24 = vld [vmem:[%s0] sm:$0xff]
  %v25 = vld [vmem:[%s0 + $0x8] sm:$0xff]
  %v26 = vpack.c.bf16 %v25, %v24
  %v27 = vld [vmem:[%s1] sm:$0xf]
  %v28 = vld [vmem:[%s1 + $0x4] sm:$0xf]
  %v29 = vld [vmem:[%s1 + $0x8] sm:$0xf]
  %v30 = vld [vmem:[%s1 + $0xc] sm:$0xf]
  %v35 = vunpack.c.l.b16 %v27
  %v36 = vunpack.c.l.b16 %v28
  %v37 = vunpack.c.l.b16 %v29
  %v38 = vunpack.c.l.b16 %v30
  %v39 = vpack.c.b16 %v36, %v35
  %v40 = vpack.c.b16 %v38, %v37
  %vm43 = vcmask 261120
  %v45 = vsel %vm43, %v26, 0
  %47 = vmatprep.subr.bf16.mxu0 0
  %48 = vmatpush1.bf16.msra.mxu0 0
  %49 = vmatprep.subr.bf16.mxu0 0
  %50 = vmatpush1.bf16.msra.mxu0 0
  %51 = vmatprep.subr.bf16.mxu0 0
  %52 = vmatpush1.bf16.msra.mxu0 0
  %53 = vmatprep.subr.bf16.mxu0 0
  %54 = vmatpush1.bf16.msra.mxu0 0
  %55 = vmatprep.subr.bf16.mxu0 0
  %56 = vmatpush1.bf16.msra.mxu0 0
  %57 = vmatprep.subr.bf16.mxu0 0
  %58 = vmatpush1.bf16.msra.mxu0 0
  %59 = vmatprep.subr.bf16.mxu0 0
  %60 = vmatpush1.bf16.msra.mxu0 %v40
  %61 = vmatprep.subr.bf16.mxu0 0
  %62 = vmatpush1.bf16.msra.mxu0 %v39
  %63 = vmatprep.subr.bf16.mxu0 0
  %64 = vmatpush2.bf16.msra.mxu0 0
  %65 = vmatprep.subr.bf16.mxu0 0
  %66 = vmatpush2.bf16.msra.mxu0 0
  %67 = vmatprep.subr.bf16.mxu0 0
  %68 = vmatpush2.bf16.msra.mxu0 0
  %69 = vmatprep.subr.bf16.mxu0 0
  %70 = vmatpush2.bf16.msra.mxu0 0
  %71 = vmatprep.subr.bf16.mxu0 0
  %72 = vmatpush2.bf16.msra.mxu0 0
  %73 = vmatprep.subr.bf16.mxu0 0
  %74 = vmatpush2.bf16.msra.mxu0 0
  %75 = vmatprep.subr.bf16.mxu0 0
  %76 = vmatpush2.bf16.msra.mxu0 0
  %77 = vmatprep.subr.bf16.mxu0 0
  %78 = vmatpush2.bf16.msra.mxu0 0
  %79 = vmatprep.mubr.bf16.mxu0 0
  %80 = vmatmul.mubr.bf16.gmra.mxu0 %v45
  %v81 = vpop.f32.mrf.mxu0
  %v82 = vadd.f32 0.0, %v81
  %v83 = vpop.f32.mrf.mxu0
  %v84 = vpop.f32.mrf.mxu0
  %v85 = vadd.f32 0.0, %v84
  %v86 = vpop.f32.mrf.mxu0
  %87 = vdwg.mxu0
  %v88 = vadd.f32 %v22, %v82
  %v89 = vadd.f32 %v23, %v85
  %vm90 = vcmask 523264
  %91 = vst.msk [vmem:[#allocation2] sm:$0xff] %vm90, %v88
  %92 = vst.msk [vmem:[#allocation2 + $0x8] sm:$0xff] %vm90, %v89
  // Predicated region
  $region18: #{_lambda_.62} parent=0 // pred_check
    %p93 = pneg %p15
  $region19: #{_lambda_.62} parent=0 // pred_check_branch
    %95 = sbr.rel (%p93) target = $region21
  $region20: #{_lambda_.62} parent=0 // pred_region
    %v96 = vld [vmem:[#allocation2] sm:$0xff]
    %v97 = vld [vmem:[#allocation2 + $0x8] sm:$0xff]
    %v98 = vld [vmem:[%s2] sm:$0x1]
    %v100 = vlaneseq
    %v101 = vshrl.u32 %v100, 7
    %v102 = vsub.s32 0, %v101
    %v103 = vrot.slane %v98, %v102
    %v105 = vadd.f32 %v96, %v103
    %v106 = vadd.f32 %v97, %v103
    %107 = vst.msk [vmem:[%s3] sm:$0xff] %vm90, %v105
    %108 = vst.msk [vmem:[%s3 + $0x8] sm:$0xff] %vm90, %v106
  $region21: #{_lambda_.62} parent=0 // pred_fallthru
    _
  // Predicated region
  $region22: #{_lambda_.62} parent=0 // pred_check
    _
  $region23: #{_lambda_.62} parent=0 // pred_check_branch
    %110 = sbr.rel (0) target = $region25
  $region24: #{_lambda_.62} parent=0 // pred_region
    _
  $region25: #{_lambda_.62} parent=0 // pred_fallthru
    _
  // Predicated region
  $region26: #{_lambda_.62} parent=0 // pred_check
    _
  $region27: #{_lambda_.62} parent=0 // pred_check_branch
    %112 = sbr.rel (0) target = $region29
  $region28: #{_lambda_.62} parent=0 // pred_region
    _
  $region29: #{_lambda_.62} parent=0 // pred_fallthru
    _

// kernel: _lambda_.47
$region0: #{_lambda_.47}
  #allocation0 [shape = 'u32[]', space=smem, size = 0x4, offset = 0x4, fixed_abs, tag = 'smem constant byte address 0x4 - core index']
  #allocation1 [shape = 'u32[144,128]{1,0:T(1,128)}', space=vmem, size = 0x12000, scoped, tag = 'internal scratch']
  #allocation2 [shape = 'f32[16,32]{1,0:T(8,128)}', space=vmem, size = 0x2000, scoped, tag = 'scratch operand']
  %s0 = inlined_call_operand.vmem [shape: f32[16,64], index: 0, kind: input, shape index: {}]
  %s1 = inlined_call_operand.vmem [shape: bf16[64,32], index: 1, kind: input, shape index: {}]
  %s2 = inlined_call_operand.vmem [shape: f32[1,32], index: 2, kind: input, shape index: {}]
  %s3 = inlined_call_operand.vmem [shape: f32[16,32], index: 3, kind: output, shape index: {}]
  %s4 = sld [smem:[#allocation0]]
  $region30: #{_lambda_.47} parent=0
    _
  %s6 = ssub.s32 1, %s4
  %s7 = scalar_select 0, %s6, %s4
  // Predicated region
  $region2: #{_lambda_.47} parent=0 // pred_check
    _
  $region3: #{_lambda_.47} parent=0 // pred_check_branch
    %9 = sbr.rel (0) target = $region5
  $region4: #{_lambda_.47} parent=0 // pred_region
    _
  $region5: #{_lambda_.47} parent=0 // pred_fallthru
    _
  // Predicated region
  $region6: #{_lambda_.47} parent=0 // pred_check
    _
  $region7: #{_lambda_.47} parent=0 // pred_check_branch
    %11 = sbr.rel (0) target = $region9
  $region8: #{_lambda_.47} parent=0 // pred_region
    _
  $region9: #{_lambda_.47} parent=0 // pred_fallthru
    _
  // Predicated region
  $region10: #{_lambda_.47} parent=0 // pred_check
    _
  $region11: #{_lambda_.47} parent=0 // pred_check_branch
    %13 = sbr.rel (0) target = $region13
  $region12: #{_lambda_.47} parent=0 // pred_region
    _
  $region13: #{_lambda_.47} parent=0 // pred_fallthru
    _
  %p15 = scmp.eq.s32.totalorder 0, 0
  // Predicated region
  $region14: #{_lambda_.47} parent=0 // pred_check
    %p16 = pneg %p15
  $region15: #{_lambda_.47} parent=0 // pred_check_branch
    %18 = sbr.rel (%p16) target = $region17
  $region16: #{_lambda_.47} parent=0 // pred_region
    %vm19 = vcmask 261120
    %20 = vst.msk [vmem:[#allocation2] sm:$0xff] %vm19, 0.0
    %21 = vst.msk [vmem:[#allocation2 + $0x8] sm:$0xff] %vm19, 0.0
  $region17: #{_lambda_.47} parent=0 // pred_fallthru
    _
  %v22 = vld [vmem:[#allocation2] sm:$0xff]
  %v23 = vld [vmem:[#allocation2 + $0x8] sm:$0xff]
  %v24 = vld [vmem:[%s0] sm:$0xff]
  %v25 = vld [vmem:[%s0 + $0x8] sm:$0xff]
  %v26 = vpack.c.bf16 %v25, %v24
  %v27 = vld [vmem:[%s1] sm:$0xf]
  %v28 = vld [vmem:[%s1 + $0x4] sm:$0xf]
  %v29 = vld [vmem:[%s1 + $0x8] sm:$0xf]
  %v30 = vld [vmem:[%s1 + $0xc] sm:$0xf]
  %v31 = vld [vmem:[%s1 + $0x10] sm:$0xf]
  %v32 = vld [vmem:[%s1 + $0x14] sm:$0xf]
  %v33 = vld [vmem:[%s1 + $0x18] sm:$0xf]
  %v34 = vld [vmem:[%s1 + $0x1c] sm:$0xf]
  %v43 = vunpack.c.l.b16 %v27
  %v44 = vunpack.c.l.b16 %v28
  %v45 = vunpack.c.l.b16 %v29
  %v46 = vunpack.c.l.b16 %v30
  %v47 = vunpack.c.l.b16 %v31
  %v48 = vunpack.c.l.b16 %v32
  %v49 = vunpack.c.l.b16 %v33
  %v50 = vunpack.c.l.b16 %v34
  %v51 = vpack.c.b16 %v44, %v43
  %v52 = vpack.c.b16 %v46, %v45
  %v53 = vpack.c.b16 %v48, %v47
  %v54 = vpack.c.b16 %v50, %v49
  %vm59 = vcmask 523264
  %v61 = vsel %vm59, %v26, 0
  %63 = vmatprep.subr.bf16.mxu0 0
  %64 = vmatpush1.bf16.msra.mxu0 0
  %65 = vmatprep.subr.bf16.mxu0 0
  %66 = vmatpush1.bf16.msra.mxu0 0
  %67 = vmatprep.subr.bf16.mxu0 0
  %68 = vmatpush1.bf16.msra.mxu0 0
  %69 = vmatprep.subr.bf16.mxu0 0
  %70 = vmatpush1.bf16.msra.mxu0 0
  %71 = vmatprep.subr.bf16.mxu0 0
  %72 = vmatpush1.bf16.msra.mxu0 %v54
  %73 = vmatprep.subr.bf16.mxu0 0
  %74 = vmatpush1.bf16.msra.mxu0 %v53
  %75 = vmatprep.subr.bf16.mxu0 0
  %76 = vmatpush1.bf16.msra.mxu0 %v52
  %77 = vmatprep.subr.bf16.mxu0 0
  %78 = vmatpush1.bf16.msra.mxu0 %v51
  %79 = vmatprep.subr.bf16.mxu0 0
  %80 = vmatpush2.bf16.msra.mxu0 0
  %81 = vmatprep.subr.bf16.mxu0 0
  %82 = vmatpush2.bf16.msra.mxu0 0
  %83 = vmatprep.subr.bf16.mxu0 0
  %84 = vmatpush2.bf16.msra.mxu0 0
  %85 = vmatprep.subr.bf16.mxu0 0
  %86 = vmatpush2.bf16.msra.mxu0 0
  %87 = vmatprep.subr.bf16.mxu0 0
  %88 = vmatpush2.bf16.msra.mxu0 0
  %89 = vmatprep.subr.bf16.mxu0 0
  %90 = vmatpush2.bf16.msra.mxu0 0
  %91 = vmatprep.subr.bf16.mxu0 0
  %92 = vmatpush2.bf16.msra.mxu0 0
  %93 = vmatprep.subr.bf16.mxu0 0
  %94 = vmatpush2.bf16.msra.mxu0 0
  %95 = vmatprep.mubr.bf16.mxu0 0
  %96 = vmatmul.mubr.bf16.gmra.mxu0 %v61
  %v97 = vpop.f32.mrf.mxu0
  %v98 = vadd.f32 0.0, %v97
  %v99 = vpop.f32.mrf.mxu0
  %v100 = vpop.f32.mrf.mxu0
  %v101 = vadd.f32 0.0, %v100
  %v102 = vpop.f32.mrf.mxu0
  %103 = vdwg.mxu0
  %v104 = vadd.f32 %v22, %v98
  %v105 = vadd.f32 %v23, %v101
  %vm106 = vcmask 261120
  %107 = vst.msk [vmem:[#allocation2] sm:$0xff] %vm106, %v104
  %108 = vst.msk [vmem:[#allocation2 + $0x8] sm:$0xff] %vm106, %v105
  // Predicated region
  $region18: #{_lambda_.47} parent=0 // pred_check
    %p109 = pneg %p15
  $region19: #{_lambda_.47} parent=0 // pred_check_branch
    %111 = sbr.rel (%p109) target = $region21
  $region20: #{_lambda_.47} parent=0 // pred_region
    %v112 = vld [vmem:[#allocation2] sm:$0xff]
    %v113 = vld [vmem:[#allocation2 + $0x8] sm:$0xff]
    %v114 = vld [vmem:[%s2] sm:$0x1]
    %v116 = vlaneseq
    %v117 = vshrl.u32 %v116, 7
    %v118 = vsub.s32 0, %v117
    %v119 = vrot.slane %v114, %v118
    %v121 = vadd.f32 %v112, %v119
    %v122 = vadd.f32 %v113, %v119
    %123 = vst.msk [vmem:[%s3] sm:$0xff] %vm106, %v121
    %124 = vst.msk [vmem:[%s3 + $0x8] sm:$0xff] %vm106, %v122
  $region21: #{_lambda_.47} parent=0 // pred_fallthru
    _
  // Predicated region
  $region22: #{_lambda_.47} parent=0 // pred_check
    _
  $region23: #{_lambda_.47} parent=0 // pred_check_branch
    %126 = sbr.rel (0) target = $region25
  $region24: #{_lambda_.47} parent=0 // pred_region
    _
  $region25: #{_lambda_.47} parent=0 // pred_fallthru
    _
  // Predicated region
  $region26: #{_lambda_.47} parent=0 // pred_check
    _
  $region27: #{_lambda_.47} parent=0 // pred_check_branch
    %128 = sbr.rel (0) target = $region29
  $region28: #{_lambda_.47} parent=0 // pred_region
    _
  $region29: #{_lambda_.47} parent=0 // pred_fallthru
    _

// kernel: _lambda_.81
$region0: #{_lambda_.81}
  #allocation0 [shape = 'u32[]', space=smem, size = 0x4, offset = 0x4, fixed_abs, tag = 'smem constant byte address 0x4 - core index']
  #allocation1 [shape = 'u32[144,128]{1,0:T(1,128)}', space=vmem, size = 0x12000, scoped, tag = 'internal scratch']
  #allocation2 [shape = 'f32[16,16]{1,0:T(8,128)}', space=vmem, size = 0x2000, scoped, tag = 'scratch operand']
  %s0 = inlined_call_operand.vmem [shape: f32[16,32], index: 0, kind: input, shape index: {}]
  %s1 = inlined_call_operand.vmem [shape: bf16[32,16], index: 1, kind: input, shape index: {}]
  %s2 = inlined_call_operand.vmem [shape: f32[1,16], index: 2, kind: input, shape index: {}]
  %s3 = inlined_call_operand.hbm [shape: f32[16,16], index: 3, kind: output, shape index: {}]
  %s4 = sld [smem:[#allocation0]]
  $region26: #{_lambda_.81} parent=0
    _
  %s6 = ssub.s32 1, %s4
  %s7 = scalar_select 0, %s6, %s4
  $region1: #{_lambda_.81} parent=0
    #allocation3 [shape = 'u8[8192]{0}', space=vmem, size = 0x2000, scoped, tag = 'output window, operand 0, single buffered']
    #allocation4 [shape = 's32[1]{0}', space=sflag, size = 0x4, scoped, tag = 'scoped memory for _lambda_.81']
    %8 = vsyncpa [#allocation4], 0
    // Predicated region
    $region2: #{_lambda_.81} parent=1 // pred_check
      _
    $region3: #{_lambda_.81} parent=1 // pred_check_branch
      %10 = sbr.rel (0) target = $region5
    $region4: #{_lambda_.81} parent=1 // pred_region
      _
    $region5: #{_lambda_.81} parent=1 // pred_fallthru
      _
    // Predicated region
    $region6: #{_lambda_.81} parent=1 // pred_check
      _
    $region7: #{_lambda_.81} parent=1 // pred_check_branch
      %12 = sbr.rel (0) target = $region9
    $region8: #{_lambda_.81} parent=1 // pred_region
      _
    $region9: #{_lambda_.81} parent=1 // pred_fallthru
      _
    // Predicated region
    $region10: #{_lambda_.81} parent=1 // pred_check
      _
    $region11: #{_lambda_.81} parent=1 // pred_check_branch
      %14 = sbr.rel (0) target = $region13
    $region12: #{_lambda_.81} parent=1 // pred_region
      _
    $region13: #{_lambda_.81} parent=1 // pred_fallthru
      _
    %v16 = vld [vmem:[%s0] sm:$0xff]
    %v17 = vld [vmem:[%s0 + $0x8] sm:$0xff]
    %v18 = vpack.c.bf16 %v17, %v16
    %v19 = vld [vmem:[%s1] sm:$0xf]
    %v20 = vld [vmem:[%s1 + $0x4] sm:$0xf]
    %v21 = vld [vmem:[%s1 + $0x8] sm:$0xf]
    %v22 = vld [vmem:[%s1 + $0xc] sm:$0xf]
    %v23 = vld [vmem:[%s2] sm:$0x1]
    %v25 = vlaneseq
    %v26 = vshrl.u32 %v25, 7
    %v27 = vsub.s32 0, %v26
    %v28 = vrot.slane %v23, %v27
    %v34 = vunpack.c.l.b16 %v19
    %v35 = vunpack.c.l.b16 %v20
    %v36 = vunpack.c.l.b16 %v21
    %v37 = vunpack.c.l.b16 %v22
    %v38 = vpack.c.b16 %v35, %v34
    %v39 = vpack.c.b16 %v37, %v36
    %vm42 = vcmask 261120
    %v44 = vsel %vm42, %v18, 0
    %46 = vmatprep.subr.bf16.mxu0 0
    %47 = vmatpush1.bf16.msra.mxu0 0
    %48 = vmatprep.subr.bf16.mxu0 0
    %49 = vmatpush1.bf16.msra.mxu0 0
    %50 = vmatprep.subr.bf16.mxu0 0
    %51 = vmatpush1.bf16.msra.mxu0 0
    %52 = vmatprep.subr.bf16.mxu0 0
    %53 = vmatpush1.bf16.msra.mxu0 0
    %54 = vmatprep.subr.bf16.mxu0 0
    %55 = vmatpush1.bf16.msra.mxu0 0
    %56 = vmatprep.subr.bf16.mxu0 0
    %57 = vmatpush1.bf16.msra.mxu0 0
    %58 = vmatprep.subr.bf16.mxu0 0
    %59 = vmatpush1.bf16.msra.mxu0 %v39
    %60 = vmatprep.subr.bf16.mxu0 0
    %61 = vmatpush1.bf16.msra.mxu0 %v38
    %62 = vmatprep.subr.bf16.mxu0 0
    %63 = vmatpush2.bf16.msra.mxu0 0
    %64 = vmatprep.subr.bf16.mxu0 0
    %65 = vmatpush2.bf16.msra.mxu0 0
    %66 = vmatprep.subr.bf16.mxu0 0
    %67 = vmatpush2.bf16.msra.mxu0 0
    %68 = vmatprep.subr.bf16.mxu0 0
    %69 = vmatpush2.bf16.msra.mxu0 0
    %70 = vmatprep.subr.bf16.mxu0 0
    %71 = vmatpush2.bf16.msra.mxu0 0
    %72 = vmatprep.subr.bf16.mxu0 0
    %73 = vmatpush2.bf16.msra.mxu0 0
    %74 = vmatprep.subr.bf16.mxu0 0
    %75 = vmatpush2.bf16.msra.mxu0 0
    %76 = vmatprep.subr.bf16.mxu0 0
    %77 = vmatpush2.bf16.msra.mxu0 0
    %78 = vmatprep.mubr.bf16.mxu0 0
    %79 = vmatmul.mubr.bf16.gmra.mxu0 %v44
    %v80 = vpop.f32.mrf.mxu0
    %v81 = vadd.f32 %v28, %v80
    %v82 = vpop.f32.mrf.mxu0
    %v83 = vpop.f32.mrf.mxu0
    %v84 = vadd.f32 %v28, %v83
    %v85 = vpop.f32.mrf.mxu0
    %86 = vdwg.mxu0
    %vm87 = vcmask 130048
    %88 = vst.msk [vmem:[#allocation2] sm:$0xff] %vm87, %v81
    %89 = vst.msk [vmem:[#allocation2 + $0x8] sm:$0xff] %vm87, %v84
    %p90 = scmp.eq.s32.totalorder 0, 0
    // Predicated region
    $region14: #{_lambda_.81} parent=1 // pred_check
      %p91 = pneg %p90
    $region15: #{_lambda_.81} parent=1 // pred_check_branch
      %93 = sbr.rel (%p91) target = $region17
    $region16: #{_lambda_.81} parent=1 // pred_region
      %v94 = vld [vmem:[#allocation2] sm:$0xff]
      %v95 = vld [vmem:[#allocation2 + $0x8] sm:$0xff]
      %v96 = vsel %vm87, %v94, -inf
      %97 = vmax.xlane.f32.xlu0 %v96
      %v98 = vpop.xlane.xlu0 %97
      %v99 = vsel %vm87, %v95, -inf
      %100 = vmax.xlane.f32.xlu0 %v99
      %v101 = vpop.xlane.xlu0 %100
      %v102 = vsub.f32 %v94, %v98
      %v103 = vsub.f32 %v95, %v101
      %v104 = vmul.f32 %v102, 1.442695
      %v105 = vpow.pop %v104
      %v106 = vmul.f32 %v103, 1.442695
      %v107 = vpow.pop %v106
      %v108 = vsel %vm87, %v105, 0.0
      %109 = vadd.xlane.f32.xlu0 %v108
      %v110 = vpop.xlane.xlu0 %109
      %v111 = vsel %vm87, %v107, 0.0
      %112 = vadd.xlane.f32.xlu0 %v111
      %v113 = vpop.xlane.xlu0 %112
      %v114 = vlog2.pop %v110
      %v115 = vmul.f32 %v114, 0.6931472
      %v116 = vlog2.pop %v113
      %v117 = vmul.f32 %v116, 0.6931472
      %v118 = vsub.f32 %v102, %v115
      %v119 = vsub.f32 %v103, %v117
      %120 = vst.msk [vmem:[#allocation3] sm:$0xff] %vm87, %v118
      %121 = vst.msk [vmem:[#allocation3 + $0x8] sm:$0xff] %vm87, %v119
    $region17: #{_lambda_.81} parent=1 // pred_fallthru
      _
    // Predicated region
    $region18: #{_lambda_.81} parent=1 // pred_check
      _
    $region19: #{_lambda_.81} parent=1 // pred_check_branch
      %123 = sbr.rel (0) target = $region21
    $region20: #{_lambda_.81} parent=1 // pred_region
      %s125 = ssub.s32 256, 256
      %126 = vsyncadd [#allocation4], %s125
      %s127 = sshll.u32 [#allocation3], 4
      %s128 = int_to_ptr.vmem [resolvable:$true] %s127
      %133 = dma.vmem_to_hbm [thread:$0]  %s128, 256, %s3, [#allocation4], 128, 128, 8
    $region21: #{_lambda_.81} parent=1 // pred_fallthru
      _
    // Predicated region
    $region22: #{_lambda_.81} parent=1 // pred_check
      _
    $region23: #{_lambda_.81} parent=1 // pred_check_branch
      %135 = sbr.rel (0) target = $region25
    $region24: #{_lambda_.81} parent=1 // pred_region
      %136 = dma.done [#allocation4], 256
    $region25: #{_lambda_.81} parent=1 // pred_fallthru
      _
    %137 = vsyncpa [#allocation4], 1

</llo_original>
